<compile_context>
chip_gen: v7x
topology: tpu7x:2x2x1
jax: 0.10.0
libtpu: 0.0.40
codegen_flags: <defaults>
</compile_context>

<pallas_src>
import math
import functools

import jax
import jax.numpy as jnp
from jax.experimental import pallas as pl
from jax.experimental.pallas import tpu as pltpu


def mha_kernel(q_ref, k_ref, v_ref,
               wq_ref, bq_ref, wk_ref, bk_ref, wv_ref, bv_ref,
               wo_ref, bo_ref, out_ref, *, h, d_k):
    """One (batch, q-tile) grid step: q block (1, tq, D), k/v blocks (1, S, D)."""
    tq = q_ref.shape[1]
    S = k_ref.shape[1]
    D = h * d_k
    scale = 1.0 / math.sqrt(d_k)

    # --- projections: bf16 operands, f32 accumulation on the MXU --------------------
    xq = q_ref[0].astype(jnp.bfloat16)          # (tq, D)
    xk = k_ref[0].astype(jnp.bfloat16)          # (S, D)
    xv = v_ref[0].astype(jnp.bfloat16)          # (S, D)

    # TODO(synk): when q, k, v are the same tensor (self-attention) the three projections
    # can be fused into a single (tq, D) x (D, 3D) matmul; kept separate here to preserve
    # the module's cross-attention generality (distinct q / k / v inputs).
    Q = jnp.dot(xq, wq_ref[...], preferred_element_type=jnp.float32) + bq_ref[...]  # (tq, D) f32
    K = jnp.dot(xk, wk_ref[...], preferred_element_type=jnp.float32) + bk_ref[...]  # (S, D)  f32
    V = jnp.dot(xv, wv_ref[...], preferred_element_type=jnp.float32) + bv_ref[...]  # (S, D)  f32

    # --- head-batched attention: no per-head loop, no explicit .T, no concatenate ----
    # Fold the 1/sqrt(d_k) scale into Q (cheaper than scaling the (h, tq, S) scores).
    Qh = (Q * scale).reshape(tq, h, d_k).transpose(1, 0, 2).astype(jnp.bfloat16)  # (h, tq, d_k)
    Kh = K.reshape(S, h, d_k).transpose(1, 0, 2).astype(jnp.bfloat16)             # (h, S, d_k)
    Vh = V.reshape(S, h, d_k).transpose(1, 0, 2).astype(jnp.bfloat16)             # (h, S, d_k)

    # scores: contract d_k directly (K consumed in its native layout), f32 accumulate.
    scores = jnp.einsum('hqd,hkd->hqk', Qh, Kh,
                        preferred_element_type=jnp.float32)                        # (h, tq, S)

    # NOTE: reference module's masked_fill result is discarded -> mask is a no-op here.
    # Softmax kept entirely in f32; divide replaced by EUP approx reciprocal.
    m = jnp.max(scores, axis=-1, keepdims=True)
    e = jnp.exp(scores - m)
    denom = jnp.sum(e, axis=-1, keepdims=True)
    p = e * pl.reciprocal(denom, approx=True)                                      # (h, tq, S) f32
    # dropout(p) -> identity (eval / deterministic inference).

    ctx = jnp.einsum('hqk,hkd->hqd', p.astype(jnp.bfloat16), Vh,
                     preferred_element_type=jnp.float32)                           # (h, tq, d_k)
    ctx = ctx.transpose(1, 0, 2).reshape(tq, D).astype(jnp.bfloat16)               # (tq, D)

    out = jnp.dot(ctx, wo_ref[...], preferred_element_type=jnp.float32) + bo_ref[...]
    out_ref[0] = out.astype(out_ref.dtype)


def multi_head_attention(q, k, v, mask, params, h, *, q_tile=256):
    del mask  # faithful: the reference's masked_fill result is discarded -> mask is a no-op
    B, Sq, D = q.shape
    Sk = k.shape[1]
    d_k = D // h
    wq, bq, wk, bk, wv, bv, wo, bo = params

    # Glue: pre-transpose Linear weights (PyTorch computes x @ W.T + b) and cast to bf16
    # for MXU-rate matmuls with f32 accumulation; biases stay f32 and 2-D for TPU layout.
    wq_t, wk_t, wv_t, wo_t = (w.T.astype(jnp.bfloat16) for w in (wq, wk, wv, wo))
    bq2, bk2, bv2, bo2 = (b.reshape(1, D) for b in (bq, bk, bv, bo))

    # Tile the query sequence so the grid has enough steps to pipeline / shard across
    # TensorCores; K/V stay full-S per batch element.
    # TODO(synk): for very long S add a flash-style inner KV loop with online softmax so
    # the (tq, S) score block and full-S K/V never exceed VMEM (mandatory on v7x).
    tq = Sq if Sq <= q_tile else q_tile
    assert Sq % tq == 0, "seq_len must be divisible by the q tile"
    n_q = Sq // tq

    kernel = functools.partial(mha_kernel, h=h, d_k=d_k)

    q_spec   = pl.BlockSpec((1, tq, D), lambda b, i: (b, i, 0))
    kv_spec  = pl.BlockSpec((1, Sk, D), lambda b, i: (b, 0, 0))
    w_spec   = pl.BlockSpec((D, D), lambda b, i: (0, 0))
    b_spec   = pl.BlockSpec((1, D), lambda b, i: (0, 0))
    out_spec = pl.BlockSpec((1, tq, D), lambda b, i: (b, i, 0))

    return pl.pallas_call(
        kernel,
        out_shape=jax.ShapeDtypeStruct((B, Sq, D), q.dtype),
        grid=(B, n_q),
        in_specs=[q_spec, kv_spec, kv_spec,
                  w_spec, b_spec, w_spec, b_spec, w_spec, b_spec,
                  w_spec, b_spec],
        out_specs=out_spec,
        compiler_params=pltpu.CompilerParams(
            dimension_semantics=("parallel", "parallel"),
            vmem_limit_bytes=48 * 1024 * 1024,
        ),
    )(q, k, v, wq_t, bq2, wk_t, bk2, wv_t, bv2, wo_t, bo2)


def _reference(q, k, v, params, h):
    """Pure-JAX f32 reference mirroring the PyTorch forward (mask no-op, dropout identity)."""
    B, S, D = q.shape
    d_k = D // h
    wq, bq, wk, bk, wv, bv, wo, bo = params
    Q = q @ wq.T + bq
    K = k @ wk.T + bk
    V = v @ wv.T + bv
    def split(x):
        return x.reshape(B, S, h, d_k).transpose(0, 2, 1, 3)  # (B, h, S, d_k)
    Qh, Kh, Vh = split(Q), split(K), split(V)
    scores = jnp.einsum("bhqd,bhkd->bhqk", Qh, Kh) / math.sqrt(d_k)
    p = jax.nn.softmax(scores, axis=-1)
    x = jnp.einsum("bhqk,bhkd->bhqd", p, Vh)
    x = x.transpose(0, 2, 1, 3).reshape(B, S, D)
    return x @ wo.T + bo


def init_params(key, d_model):
    """Deterministic PyTorch-Linear-style init: U(-1/sqrt(in), 1/sqrt(in))."""
    bound = 1.0 / math.sqrt(d_model)
    keys = jax.random.split(key, 8)
    def u(k, shape):
        return jax.random.uniform(k, shape, jnp.float32, -bound, bound)
    wq, bq = u(keys[0], (d_model, d_model)), u(keys[1], (d_model,))
    wk, bk = u(keys[2], (d_model, d_model)), u(keys[3], (d_model,))
    wv, bv = u(keys[4], (d_model, d_model)), u(keys[5], (d_model,))
    wo, bo = u(keys[6], (d_model, d_model)), u(keys[7], (d_model,))
    return (wq, bq, wk, bk, wv, bv, wo, bo)


if __name__ == "__main__":
    B, S, d_model, h = 2, 8, 32, 4

    root = jax.random.PRNGKey(0)
    kp, kq, kk, kv = jax.random.split(root, 4)
    params = init_params(kp, d_model)

    q = jax.random.normal(kq, (B, S, d_model), jnp.float32)
    k = jax.random.normal(kk, (B, S, d_model), jnp.float32)
    v = jax.random.normal(kv, (B, S, d_model), jnp.float32)
    mask = jnp.ones((B, 1, S, S), jnp.float32)  # unused (see faithfulness note)

    out = multi_head_attention(q, k, v, mask, params, h)
    out = jax.block_until_ready(out)

    ref = _reference(q, k, v, params, h)
    assert out.shape == (B, S, d_model)
    # bf16 MXU operands (f32 accumulation) -> compare against the f32 reference loosely.
    max_err = float(jnp.max(jnp.abs(out - ref)))
    assert max_err < 5e-2, f"max abs error {max_err}"

    print("KERNEL_OK")
</pallas_src>

<mosaic_0001>
module attributes {stable_mosaic.version = 11 : i64} {
  func.func @mha_kernel(%arg0: i32, %arg1: i32, %arg2: memref<1x8x32xf32, #tpu.memory_space<vmem>>, %arg3: memref<1x8x32xf32, #tpu.memory_space<vmem>>, %arg4: memref<1x8x32xf32, #tpu.memory_space<vmem>>, %arg5: memref<32x32xbf16, #tpu.memory_space<vmem>>, %arg6: memref<1x32xf32, #tpu.memory_space<vmem>>, %arg7: memref<32x32xbf16, #tpu.memory_space<vmem>>, %arg8: memref<1x32xf32, #tpu.memory_space<vmem>>, %arg9: memref<32x32xbf16, #tpu.memory_space<vmem>>, %arg10: memref<1x32xf32, #tpu.memory_space<vmem>>, %arg11: memref<32x32xbf16, #tpu.memory_space<vmem>>, %arg12: memref<1x32xf32, #tpu.memory_space<vmem>>, %arg13: memref<1x8x32xf32, #tpu.memory_space<vmem>>) attributes {dimension_semantics = [#tpu.dimension_semantics<parallel>, #tpu.dimension_semantics<parallel>], iteration_bounds = array<i64: 2, 1>, scalar_prefetch = 0 : i64, scratch_operands = 0 : i64, tpu.core_type = #tpu.core_type<tc>, window_params = [{transform_indices = @transform_0, window_bounds = array<i64: 1, 8, 32>}, {transform_indices = @transform_1, window_bounds = array<i64: 1, 8, 32>}, {transform_indices = @transform_2, window_bounds = array<i64: 1, 8, 32>}, {pipeline_mode = #tpu.pipeline_mode<synchronous>, transform_indices = @transform_3, window_bounds = array<i64: 32, 32>}, {pipeline_mode = #tpu.pipeline_mode<synchronous>, transform_indices = @transform_4, window_bounds = array<i64: 1, 32>}, {pipeline_mode = #tpu.pipeline_mode<synchronous>, transform_indices = @transform_5, window_bounds = array<i64: 32, 32>}, {pipeline_mode = #tpu.pipeline_mode<synchronous>, transform_indices = @transform_6, window_bounds = array<i64: 1, 32>}, {pipeline_mode = #tpu.pipeline_mode<synchronous>, transform_indices = @transform_7, window_bounds = array<i64: 32, 32>}, {pipeline_mode = #tpu.pipeline_mode<synchronous>, transform_indices = @transform_8, window_bounds = array<i64: 1, 32>}, {pipeline_mode = #tpu.pipeline_mode<synchronous>, transform_indices = @transform_9, window_bounds = array<i64: 32, 32>}, {pipeline_mode = #tpu.pipeline_mode<synchronous>, transform_indices = @transform_10, window_bounds = array<i64: 1, 32>}, {transform_indices = @transform_11, window_bounds = array<i64: 1, 8, 32>}]} {
    %c0 = arith.constant 0 : index
    %c0_0 = arith.constant 0 : index
    %c0_1 = arith.constant 0 : index
    %0 = vector.load %arg2[%c0, %c0_0, %c0_1] : memref<1x8x32xf32, #tpu.memory_space<vmem>>, vector<1x8x32xf32>
    %1 = vector.shape_cast %0 : vector<1x8x32xf32> to vector<8x32xf32>
    %2 = arith.truncf %1 : vector<8x32xf32> to vector<8x32xbf16>
    %c0_2 = arith.constant 0 : index
    %c0_3 = arith.constant 0 : index
    %c0_4 = arith.constant 0 : index
    %3 = vector.load %arg3[%c0_2, %c0_3, %c0_4] : memref<1x8x32xf32, #tpu.memory_space<vmem>>, vector<1x8x32xf32>
    %4 = vector.shape_cast %3 : vector<1x8x32xf32> to vector<8x32xf32>
    %5 = arith.truncf %4 : vector<8x32xf32> to vector<8x32xbf16>
    %c0_5 = arith.constant 0 : index
    %c0_6 = arith.constant 0 : index
    %c0_7 = arith.constant 0 : index
    %6 = vector.load %arg4[%c0_5, %c0_6, %c0_7] : memref<1x8x32xf32, #tpu.memory_space<vmem>>, vector<1x8x32xf32>
    %7 = vector.shape_cast %6 : vector<1x8x32xf32> to vector<8x32xf32>
    %8 = arith.truncf %7 : vector<8x32xf32> to vector<8x32xbf16>
    %c0_8 = arith.constant 0 : index
    %c0_9 = arith.constant 0 : index
    %9 = vector.load %arg5[%c0_8, %c0_9] : memref<32x32xbf16, #tpu.memory_space<vmem>>, vector<32x32xbf16>
    %cst = arith.constant dense<0.000000e+00> : vector<8x32xf32>
    %10 = tpu.matmul %2, %9, %cst {dimension_numbers = #tpu.dot_dimension_numbers<[1], [0], [0], [1], [0, 0, 1, 1], [], []>} : vector<8x32xbf16>, vector<32x32xbf16>, vector<8x32xf32> -> vector<8x32xf32>
    %c0_10 = arith.constant 0 : index
    %c0_11 = arith.constant 0 : index
    %11 = vector.load %arg6[%c0_10, %c0_11] : memref<1x32xf32, #tpu.memory_space<vmem>>, vector<1x32xf32>
    %12 = vector.broadcast %11 : vector<1x32xf32> to vector<8x32xf32>
    %13 = arith.addf %10, %12 : vector<8x32xf32>
    %c0_12 = arith.constant 0 : index
    %c0_13 = arith.constant 0 : index
    %14 = vector.load %arg7[%c0_12, %c0_13] : memref<32x32xbf16, #tpu.memory_space<vmem>>, vector<32x32xbf16>
    %cst_14 = arith.constant dense<0.000000e+00> : vector<8x32xf32>
    %15 = tpu.matmul %5, %14, %cst_14 {dimension_numbers = #tpu.dot_dimension_numbers<[1], [0], [0], [1], [0, 0, 1, 1], [], []>} : vector<8x32xbf16>, vector<32x32xbf16>, vector<8x32xf32> -> vector<8x32xf32>
    %c0_15 = arith.constant 0 : index
    %c0_16 = arith.constant 0 : index
    %16 = vector.load %arg8[%c0_15, %c0_16] : memref<1x32xf32, #tpu.memory_space<vmem>>, vector<1x32xf32>
    %17 = vector.broadcast %16 : vector<1x32xf32> to vector<8x32xf32>
    %18 = arith.addf %15, %17 : vector<8x32xf32>
    %c0_17 = arith.constant 0 : index
    %c0_18 = arith.constant 0 : index
    %19 = vector.load %arg9[%c0_17, %c0_18] : memref<32x32xbf16, #tpu.memory_space<vmem>>, vector<32x32xbf16>
    %cst_19 = arith.constant dense<0.000000e+00> : vector<8x32xf32>
    %20 = tpu.matmul %8, %19, %cst_19 {dimension_numbers = #tpu.dot_dimension_numbers<[1], [0], [0], [1], [0, 0, 1, 1], [], []>} : vector<8x32xbf16>, vector<32x32xbf16>, vector<8x32xf32> -> vector<8x32xf32>
    %c0_20 = arith.constant 0 : index
    %c0_21 = arith.constant 0 : index
    %21 = vector.load %arg10[%c0_20, %c0_21] : memref<1x32xf32, #tpu.memory_space<vmem>>, vector<1x32xf32>
    %22 = vector.broadcast %21 : vector<1x32xf32> to vector<8x32xf32>
    %23 = arith.addf %20, %22 : vector<8x32xf32>
    %cst_22 = arith.constant 0.353553385 : f32
    %24 = vector.broadcast %cst_22 : f32 to vector<8x32xf32>
    %25 = arith.mulf %13, %24 : vector<8x32xf32>
    %26 = vector.shape_cast %25 : vector<8x32xf32> to vector<8x4x8xf32>
    %27 = tpu.transpose %26, [1, 0, 2] : vector<8x4x8xf32> -> vector<4x8x8xf32>
    %28 = arith.truncf %27 : vector<4x8x8xf32> to vector<4x8x8xbf16>
    %29 = vector.shape_cast %18 : vector<8x32xf32> to vector<8x4x8xf32>
    %30 = tpu.transpose %29, [1, 0, 2] : vector<8x4x8xf32> -> vector<4x8x8xf32>
    %31 = arith.truncf %30 : vector<4x8x8xf32> to vector<4x8x8xbf16>
    %32 = vector.shape_cast %23 : vector<8x32xf32> to vector<8x4x8xf32>
    %33 = tpu.transpose %32, [1, 0, 2] : vector<8x4x8xf32> -> vector<4x8x8xf32>
    %34 = arith.truncf %33 : vector<4x8x8xf32> to vector<4x8x8xbf16>
    "tpu.trace_start"() <{level = 10 : i32, message = "hqd,hkd->hqk"}> : () -> ()
    %cst_23 = arith.constant dense<0.000000e+00> : vector<4x8x8xf32>
    %35 = tpu.matmul %28, %31, %cst_23 {dimension_numbers = #tpu.dot_dimension_numbers<[2], [2], [1], [1], [0, 0, 0, 1, 1, 1], [0], [0]>} : vector<4x8x8xbf16>, vector<4x8x8xbf16>, vector<4x8x8xf32> -> vector<4x8x8xf32>
    "tpu.trace_stop"() : () -> ()
    %cst_24 = arith.constant dense<0xFF800000> : vector<4x8xf32>
    %36 = vector.multi_reduction <maximumf>, %35, %cst_24 [2] : vector<4x8x8xf32> to vector<4x8xf32>
    %37 = vector.shape_cast %36 : vector<4x8xf32> to vector<4x8x1xf32>
    %38 = vector.broadcast %37 : vector<4x8x1xf32> to vector<4x8x8xf32>
    %39 = arith.subf %35, %38 : vector<4x8x8xf32>
    %40 = math.exp %39 : vector<4x8x8xf32>
    %cst_25 = arith.constant dense<0.000000e+00> : vector<4x8xf32>
    %41 = vector.multi_reduction <add>, %40, %cst_25 [2] : vector<4x8x8xf32> to vector<4x8xf32>
    %42 = vector.shape_cast %41 : vector<4x8xf32> to vector<4x8x1xf32>
    %43 = tpu.reciprocal %42 {approx = true} : vector<4x8x1xf32> -> vector<4x8x1xf32>
    %44 = vector.broadcast %43 : vector<4x8x1xf32> to vector<4x8x8xf32>
    %45 = arith.mulf %40, %44 : vector<4x8x8xf32>
    %46 = arith.truncf %45 : vector<4x8x8xf32> to vector<4x8x8xbf16>
    "tpu.trace_start"() <{level = 10 : i32, message = "hqk,hkd->hqd"}> : () -> ()
    %cst_26 = arith.constant dense<0.000000e+00> : vector<4x8x8xf32>
    %47 = tpu.matmul %46, %34, %cst_26 {dimension_numbers = #tpu.dot_dimension_numbers<[2], [1], [1], [2], [0, 0, 0, 1, 1, 2], [0], [0]>} : vector<4x8x8xbf16>, vector<4x8x8xbf16>, vector<4x8x8xf32> -> vector<4x8x8xf32>
    "tpu.trace_stop"() : () -> ()
    %48 = tpu.transpose %47, [1, 0, 2] : vector<4x8x8xf32> -> vector<8x4x8xf32>
    %49 = vector.shape_cast %48 : vector<8x4x8xf32> to vector<8x32xf32>
    %50 = arith.truncf %49 : vector<8x32xf32> to vector<8x32xbf16>
    %c0_27 = arith.constant 0 : index
    %c0_28 = arith.constant 0 : index
    %51 = vector.load %arg11[%c0_27, %c0_28] : memref<32x32xbf16, #tpu.memory_space<vmem>>, vector<32x32xbf16>
    %cst_29 = arith.constant dense<0.000000e+00> : vector<8x32xf32>
    %52 = tpu.matmul %50, %51, %cst_29 {dimension_numbers = #tpu.dot_dimension_numbers<[1], [0], [0], [1], [0, 0, 1, 1], [], []>} : vector<8x32xbf16>, vector<32x32xbf16>, vector<8x32xf32> -> vector<8x32xf32>
    %c0_30 = arith.constant 0 : index
    %c0_31 = arith.constant 0 : index
    %53 = vector.load %arg12[%c0_30, %c0_31] : memref<1x32xf32, #tpu.memory_space<vmem>>, vector<1x32xf32>
    %54 = vector.broadcast %53 : vector<1x32xf32> to vector<8x32xf32>
    %55 = arith.addf %52, %54 : vector<8x32xf32>
    %c0_32 = arith.constant 0 : index
    %c0_33 = arith.constant 0 : index
    %c0_34 = arith.constant 0 : index
    %56 = vector.load %arg13[%c0_32, %c0_33, %c0_34] : memref<1x8x32xf32, #tpu.memory_space<vmem>>, vector<1x8x32xf32>
    %57 = vector.shape_cast %56 : vector<1x8x32xf32> to vector<8x32xf32>
    %58 = vector.shape_cast %55 : vector<8x32xf32> to vector<1x8x32xf32>
    tpu.vector_store %arg13[%c0_32, %c0_33, %c0_34], %58 {strides = array<i32>} : memref<1x8x32xf32, #tpu.memory_space<vmem>>, vector<1x8x32xf32>,
    return
  }
  func.func @transform_0(%arg0: i32, %arg1: i32) -> (i32, i32, i32) {
    %c0_i32 = arith.constant 0 : i32
    %c0_i32_0 = arith.constant 0 : i32
    return %arg0, %arg1, %c0_i32 : i32, i32, i32
  }
  func.func @transform_1(%arg0: i32, %arg1: i32) -> (i32, i32, i32) {
    %c0_i32 = arith.constant 0 : i32
    %c0_i32_0 = arith.constant 0 : i32
    %c0_i32_1 = arith.constant 0 : i32
    return %arg0, %c0_i32, %c0_i32_0 : i32, i32, i32
  }
  func.func @transform_2(%arg0: i32, %arg1: i32) -> (i32, i32, i32) {
    %c0_i32 = arith.constant 0 : i32
    %c0_i32_0 = arith.constant 0 : i32
    %c0_i32_1 = arith.constant 0 : i32
    return %arg0, %c0_i32, %c0_i32_0 : i32, i32, i32
  }
  func.func @transform_3(%arg0: i32, %arg1: i32) -> (i32, i32) {
    %c0_i32 = arith.constant 0 : i32
    %c0_i32_0 = arith.constant 0 : i32
    %c0_i32_1 = arith.constant 0 : i32
    return %c0_i32, %c0_i32_0 : i32, i32
  }
  func.func @transform_4(%arg0: i32, %arg1: i32) -> (i32, i32) {
    %c0_i32 = arith.constant 0 : i32
    %c0_i32_0 = arith.constant 0 : i32
    %c0_i32_1 = arith.constant 0 : i32
    return %c0_i32, %c0_i32_0 : i32, i32
  }
  func.func @transform_5(%arg0: i32, %arg1: i32) -> (i32, i32) {
    %c0_i32 = arith.constant 0 : i32
    %c0_i32_0 = arith.constant 0 : i32
    %c0_i32_1 = arith.constant 0 : i32
    return %c0_i32, %c0_i32_0 : i32, i32
  }
  func.func @transform_6(%arg0: i32, %arg1: i32) -> (i32, i32) {
    %c0_i32 = arith.constant 0 : i32
    %c0_i32_0 = arith.constant 0 : i32
    %c0_i32_1 = arith.constant 0 : i32
    return %c0_i32, %c0_i32_0 : i32, i32
  }
  func.func @transform_7(%arg0: i32, %arg1: i32) -> (i32, i32) {
    %c0_i32 = arith.constant 0 : i32
    %c0_i32_0 = arith.constant 0 : i32
    %c0_i32_1 = arith.constant 0 : i32
    return %c0_i32, %c0_i32_0 : i32, i32
  }
  func.func @transform_8(%arg0: i32, %arg1: i32) -> (i32, i32) {
    %c0_i32 = arith.constant 0 : i32
    %c0_i32_0 = arith.constant 0 : i32
    %c0_i32_1 = arith.constant 0 : i32
    return %c0_i32, %c0_i32_0 : i32, i32
  }
  func.func @transform_9(%arg0: i32, %arg1: i32) -> (i32, i32) {
    %c0_i32 = arith.constant 0 : i32
    %c0_i32_0 = arith.constant 0 : i32
    %c0_i32_1 = arith.constant 0 : i32
    return %c0_i32, %c0_i32_0 : i32, i32
  }
  func.func @transform_10(%arg0: i32, %arg1: i32) -> (i32, i32) {
    %c0_i32 = arith.constant 0 : i32
    %c0_i32_0 = arith.constant 0 : i32
    %c0_i32_1 = arith.constant 0 : i32
    return %c0_i32, %c0_i32_0 : i32, i32
  }
  func.func @transform_11(%arg0: i32, %arg1: i32) -> (i32, i32, i32) {
    %c0_i32 = arith.constant 0 : i32
    %c0_i32_0 = arith.constant 0 : i32
    return %arg0, %arg1, %c0_i32 : i32, i32, i32
  }
}

</mosaic_0001>

<llo_original>
// kernel: tpu_custom_call.1
$region0: #{tpu_custom_call.1}
  #allocation0 [shape = 'u32[]', space=smem, size = 0x4, offset = 0x4, fixed_abs, tag = 'smem constant byte address 0x4 - core index']
  #allocation1 [shape = 'u32[144,128]{1,0:T(1,128)}', space=vmem, size = 0x12000, scoped, tag = 'internal scratch']
  %s0 = inlined_call_operand.hbm [shape: f32[2,8,32], index: 0, kind: input, shape index: {}]
  %s1 = inlined_call_operand.hbm [shape: f32[2,8,32], index: 1, kind: input, shape index: {}]
  %s2 = inlined_call_operand.hbm [shape: f32[2,8,32], index: 2, kind: input, shape index: {}]
  %s3 = inlined_call_operand.hbm [shape: bf16[32,32], index: 3, kind: input, shape index: {}]
  %s4 = inlined_call_operand.vmem [shape: f32[1,32], index: 4, kind: input, shape index: {}]
  %s5 = inlined_call_operand.vmem [shape: bf16[32,32], index: 5, kind: input, shape index: {}]
  %s6 = inlined_call_operand.vmem [shape: f32[1,32], index: 6, kind: input, shape index: {}]
  %s7 = inlined_call_operand.hbm [shape: bf16[32,32], index: 7, kind: input, shape index: {}]
  %s8 = inlined_call_operand.hbm [shape: f32[1,32], index: 8, kind: input, shape index: {}]
  %s9 = inlined_call_operand.vmem [shape: bf16[32,32], index: 9, kind: input, shape index: {}]
  %s10 = inlined_call_operand.vmem [shape: f32[1,32], index: 10, kind: input, shape index: {}]
  %s11 = inlined_call_operand.hbm [shape: f32[2,8,32], index: 11, kind: output, shape index: {}]
  %s12 = sld [smem:[#allocation0]]
  $region101: #{tpu_custom_call.1} parent=0
    _
  %s14 = ssub.s32 1, %s12
  %s15 = scalar_select 0, %s14, %s12
  $region1: #{tpu_custom_call.1} parent=0
    #allocation2 [shape = 'u8[8192]{0}', space=vmem, size = 0x2000, scoped, tag = 'input window, operand 0']
    #allocation3 [shape = 's32[2]{0}', space=sflag, size = 0x8, scoped, tag = 'scoped memory for tpu_custom_call.1']
    #allocation4 [shape = 's32[2]{0}', space=sflag, size = 0x8, scoped, tag = 'scoped memory for tpu_custom_call.1']
    #allocation5 [shape = 'u8[8192]{0}', space=vmem, size = 0x2000, scoped, tag = 'input window, operand 1']
    #allocation6 [shape = 's32[2]{0}', space=sflag, size = 0x8, scoped, tag = 'scoped memory for tpu_custom_call.1']
    #allocation7 [shape = 'u8[8192]{0}', space=vmem, size = 0x2000, scoped, tag = 'input window, operand 2']
    #allocation8 [shape = 'u8[8192]{0}', space=vmem, size = 0x2000, scoped, tag = 'input window, operand 3, single buffered']
    #allocation9 [shape = 's32[1]{0}', space=sflag, size = 0x4, scoped, tag = 'scoped memory for tpu_custom_call.1']
    #allocation10 [shape = 'u8[8192]{0}', space=vmem, size = 0x2000, scoped, tag = 'input window, operand 7, single buffered']
    #allocation11 [shape = 'u8[512]{0}', space=vmem, size = 0x400, scoped, tag = 'input window, operand 8, single buffered']
    #allocation12 [shape = 's32[1]{0}', space=sflag, size = 0x4, scoped, tag = 'scoped memory for tpu_custom_call.1']
    #allocation13 [shape = 'u8[8192]{0}', space=vmem, size = 0x2000, scoped, tag = 'output window, operand 0']
    %16 = vsyncpa [#allocation3], 0
    %s17 = scalar_lea.sflag [#allocation3], 1
    %18 = vsyncpa %s17, 0
    %19 = vsyncpa [#allocation6], 0
    %s20 = scalar_lea.sflag [#allocation6], 1
    %21 = vsyncpa %s20, 0
    %22 = vsyncpa [#allocation9], 0
    %23 = vsyncpa [#allocation12], 0
    %24 = vsyncpa [#allocation4], 0
    %s25 = scalar_lea.sflag [#allocation4], 1
    %26 = vsyncpa %s25, 0
    loop: start=0, step=1, limit=4
    $region2: #{tpu_custom_call.1} parent=1 // loop_pre_header
      _
    $region3: #{tpu_custom_call.1} parent=1 // loop_header
      %s28 = sphi 0, %s32
      %p29 = scmp.ge.s32.totalorder %s28, 4
      %s35 = sphi 0, %s47
      %s36 = sphi 0, %s43
      %s37 = sphi 0, %s35
      %s38 = sphi 0, %s36
      %s39 = sphi 0, %s37
      %s40 = sphi 0, %s38
      %s52 = sphi 0, %s54
      %s55 = sphi 0, %s52
      %s56 = sphi 0, %s55
      %s72 = sphi 0, %s56
      %s78 = sphi 0, %s80
      %s81 = sphi 0, %s78
      %s82 = sphi 0, %s81
      %s98 = sphi 0, %s82
      %s104 = sphi 0, %s106
      %s107 = sphi 0, %s104
      %s108 = sphi 0, %s107
      %s124 = sphi 0, %s108
      %s128 = sphi 0, %s128
      %s130 = sphi 0, %s128
      %s131 = sphi 0, %s130
      %s145 = sphi 0, %s131
      %s149 = sphi 0, %s149
      %s151 = sphi 0, %s149
      %s152 = sphi 0, %s151
      %s166 = sphi 0, %s152
      %s170 = sphi 0, %s170
      %s172 = sphi 0, %s170
      %s173 = sphi 0, %s172
      %s187 = sphi 0, %s173
      %s191 = sphi 0, %s191
      %s193 = sphi 0, %s191
      %s194 = sphi 0, %s193
      %s208 = sphi 0, %s194
      %s212 = sphi 0, %s212
      %s214 = sphi 0, %s212
      %s215 = sphi 0, %s214
      %s229 = sphi 0, %s215
      %s233 = sphi 0, %s233
      %s235 = sphi 0, %s233
      %s236 = sphi 0, %s235
      %s250 = sphi 0, %s236
      %s254 = sphi 0, %s254
      %s256 = sphi 0, %s254
      %s257 = sphi 0, %s256
      %s271 = sphi 0, %s257
      %s275 = sphi 0, %s275
      %s277 = sphi 0, %s275
      %s278 = sphi 0, %s277
      %s292 = sphi 0, %s278
      %s300 = sphi 0, %s302
      %s303 = sphi 0, %s300
      %s304 = sphi 0, %s303
      %s320 = sphi 0, %s304
    $region4: #{tpu_custom_call.1} parent=1 // loop_header_branch
      %31 = sbr.rel (%p29) target = $region8
    $region5: #{tpu_custom_call.1} parent=1 // loop_body
      %s33 = ssub.s32 %s28, 1
      %s34 = ssub.s32 %s28, 2
      %s41 = sadd.s32 1, %s36
      %p42 = scmp.ge.s32.totalorder %s41, 1
      %s43 = scalar_select %p42, 0, %s41
      %s44 = sadd.s32 1, %s35
      %s45 = scalar_select %p42, %s44, %s35
      %p46 = scmp.ge.s32.totalorder %s45, 2
      %s47 = scalar_select %p46, 0, %s45
      %s48 = ssub.s32 %s35, %s47
      %s49 = ssub.s32 %s36, %s43
      %s50 = sor.u32 %s48, %s49
      %p51 = scmp.eq.s32.totalorder %s50, 0
      %s53 = sadd.s32 %s52, 1
      %s54 = scalar_select %p51, %s52, %s53
      %p57 = pneg %p51
      %p58 = scmp.eq.s32.totalorder %s28, 1
      %p59 = por %p57, %p58
      %p60 = scmp.ne.s32.totalorder %s52, %s55
      %p61 = scmp.eq.s32.totalorder %s28, 0
      %p62 = por %p60, %p61
      %p63 = scmp.ne.s32.totalorder %s52, %s55
      %p64 = scmp.eq.s32.totalorder %s33, 1
      %p65 = por %p63, %p64
      %p66 = scmp.ne.s32.totalorder %s55, %s56
      %p67 = scmp.eq.s32.totalorder %s33, 0
      %p68 = por %p66, %p67
      %p69 = scmp.ne.s32.totalorder %s55, %s56
      %p70 = scmp.eq.s32.totalorder %s34, 1
      %p71 = por %p69, %p70
      %p73 = scmp.ne.s32.totalorder %s56, %s72
      %p74 = scmp.eq.s32.totalorder %s34, 0
      %p75 = por %p73, %p74
      %s76 = ssub.s32 %s35, %s47
      %p77 = scmp.eq.s32.totalorder %s76, 0
      %s79 = sadd.s32 %s78, 1
      %s80 = scalar_select %p77, %s78, %s79
      %p83 = pneg %p77
      %p84 = scmp.eq.s32.totalorder %s28, 1
      %p85 = por %p83, %p84
      %p86 = scmp.ne.s32.totalorder %s78, %s81
      %p87 = scmp.eq.s32.totalorder %s28, 0
      %p88 = por %p86, %p87
      %p89 = scmp.ne.s32.totalorder %s78, %s81
      %p90 = scmp.eq.s32.totalorder %s33, 1
      %p91 = por %p89, %p90
      %p92 = scmp.ne.s32.totalorder %s81, %s82
      %p93 = scmp.eq.s32.totalorder %s33, 0
      %p94 = por %p92, %p93
      %p95 = scmp.ne.s32.totalorder %s81, %s82
      %p96 = scmp.eq.s32.totalorder %s34, 1
      %p97 = por %p95, %p96
      %p99 = scmp.ne.s32.totalorder %s82, %s98
      %p100 = scmp.eq.s32.totalorder %s34, 0
      %p101 = por %p99, %p100
      %s102 = ssub.s32 %s35, %s47
      %p103 = scmp.eq.s32.totalorder %s102, 0
      %s105 = sadd.s32 %s104, 1
      %s106 = scalar_select %p103, %s104, %s105
      %p109 = pneg %p103
      %p110 = scmp.eq.s32.totalorder %s28, 1
      %p111 = por %p109, %p110
      %p112 = scmp.ne.s32.totalorder %s104, %s107
      %p113 = scmp.eq.s32.totalorder %s28, 0
      %p114 = por %p112, %p113
      %p115 = scmp.ne.s32.totalorder %s104, %s107
      %p116 = scmp.eq.s32.totalorder %s33, 1
      %p117 = por %p115, %p116
      %p118 = scmp.ne.s32.totalorder %s107, %s108
      %p119 = scmp.eq.s32.totalorder %s33, 0
      %p120 = por %p118, %p119
      %p121 = scmp.ne.s32.totalorder %s107, %s108
      %p122 = scmp.eq.s32.totalorder %s34, 1
      %p123 = por %p121, %p122
      %p125 = scmp.ne.s32.totalorder %s108, %s124
      %p126 = scmp.eq.s32.totalorder %s34, 0
      %p127 = por %p125, %p126
      %s129 = sadd.s32 %s128, 1
      %p132 = scmp.eq.s32.totalorder %s28, 1
      %p133 = scmp.ne.s32.totalorder %s128, %s130
      %p134 = scmp.eq.s32.totalorder %s28, 0
      %p135 = por %p133, %p134
      %p136 = scmp.ne.s32.totalorder %s128, %s130
      %p137 = scmp.eq.s32.totalorder %s33, 1
      %p138 = por %p136, %p137
      %p139 = scmp.ne.s32.totalorder %s130, %s131
      %p140 = scmp.eq.s32.totalorder %s33, 0
      %p141 = por %p139, %p140
      %p142 = scmp.ne.s32.totalorder %s130, %s131
      %p143 = scmp.eq.s32.totalorder %s34, 1
      %p144 = por %p142, %p143
      %p146 = scmp.ne.s32.totalorder %s131, %s145
      %p147 = scmp.eq.s32.totalorder %s34, 0
      %p148 = por %p146, %p147
      %s150 = sadd.s32 %s149, 1
      %p153 = scmp.eq.s32.totalorder %s28, 1
      %p154 = scmp.ne.s32.totalorder %s149, %s151
      %p155 = scmp.eq.s32.totalorder %s28, 0
      %p156 = por %p154, %p155
      %p157 = scmp.ne.s32.totalorder %s149, %s151
      %p158 = scmp.eq.s32.totalorder %s33, 1
      %p159 = por %p157, %p158
      %p160 = scmp.ne.s32.totalorder %s151, %s152
      %p161 = scmp.eq.s32.totalorder %s33, 0
      %p162 = por %p160, %p161
      %p163 = scmp.ne.s32.totalorder %s151, %s152
      %p164 = scmp.eq.s32.totalorder %s34, 1
      %p165 = por %p163, %p164
      %p167 = scmp.ne.s32.totalorder %s152, %s166
      %p168 = scmp.eq.s32.totalorder %s34, 0
      %p169 = por %p167, %p168
      %s171 = sadd.s32 %s170, 1
      %p174 = scmp.eq.s32.totalorder %s28, 1
      %p175 = scmp.ne.s32.totalorder %s170, %s172
      %p176 = scmp.eq.s32.totalorder %s28, 0
      %p177 = por %p175, %p176
      %p178 = scmp.ne.s32.totalorder %s170, %s172
      %p179 = scmp.eq.s32.totalorder %s33, 1
      %p180 = por %p178, %p179
      %p181 = scmp.ne.s32.totalorder %s172, %s173
      %p182 = scmp.eq.s32.totalorder %s33, 0
      %p183 = por %p181, %p182
      %p184 = scmp.ne.s32.totalorder %s172, %s173
      %p185 = scmp.eq.s32.totalorder %s34, 1
      %p186 = por %p184, %p185
      %p188 = scmp.ne.s32.totalorder %s173, %s187
      %p189 = scmp.eq.s32.totalorder %s34, 0
      %p190 = por %p188, %p189
      %s192 = sadd.s32 %s191, 1
      %p195 = scmp.eq.s32.totalorder %s28, 1
      %p196 = scmp.ne.s32.totalorder %s191, %s193
      %p197 = scmp.eq.s32.totalorder %s28, 0
      %p198 = por %p196, %p197
      %p199 = scmp.ne.s32.totalorder %s191, %s193
      %p200 = scmp.eq.s32.totalorder %s33, 1
      %p201 = por %p199, %p200
      %p202 = scmp.ne.s32.totalorder %s193, %s194
      %p203 = scmp.eq.s32.totalorder %s33, 0
      %p204 = por %p202, %p203
      %p205 = scmp.ne.s32.totalorder %s193, %s194
      %p206 = scmp.eq.s32.totalorder %s34, 1
      %p207 = por %p205, %p206
      %p209 = scmp.ne.s32.totalorder %s194, %s208
      %p210 = scmp.eq.s32.totalorder %s34, 0
      %p211 = por %p209, %p210
      %s213 = sadd.s32 %s212, 1
      %p216 = scmp.eq.s32.totalorder %s28, 1
      %p217 = scmp.ne.s32.totalorder %s212, %s214
      %p218 = scmp.eq.s32.totalorder %s28, 0
      %p219 = por %p217, %p218
      %p220 = scmp.ne.s32.totalorder %s212, %s214
      %p221 = scmp.eq.s32.totalorder %s33, 1
      %p222 = por %p220, %p221
      %p223 = scmp.ne.s32.totalorder %s214, %s215
      %p224 = scmp.eq.s32.totalorder %s33, 0
      %p225 = por %p223, %p224
      %p226 = scmp.ne.s32.totalorder %s214, %s215
      %p227 = scmp.eq.s32.totalorder %s34, 1
      %p228 = por %p226, %p227
      %p230 = scmp.ne.s32.totalorder %s215, %s229
      %p231 = scmp.eq.s32.totalorder %s34, 0
      %p232 = por %p230, %p231
      %s234 = sadd.s32 %s233, 1
      %p237 = scmp.eq.s32.totalorder %s28, 1
      %p238 = scmp.ne.s32.totalorder %s233, %s235
      %p239 = scmp.eq.s32.totalorder %s28, 0
      %p240 = por %p238, %p239
      %p241 = scmp.ne.s32.totalorder %s233, %s235
      %p242 = scmp.eq.s32.totalorder %s33, 1
      %p243 = por %p241, %p242
      %p244 = scmp.ne.s32.totalorder %s235, %s236
      %p245 = scmp.eq.s32.totalorder %s33, 0
      %p246 = por %p244, %p245
      %p247 = scmp.ne.s32.totalorder %s235, %s236
      %p248 = scmp.eq.s32.totalorder %s34, 1
      %p249 = por %p247, %p248
      %p251 = scmp.ne.s32.totalorder %s236, %s250
      %p252 = scmp.eq.s32.totalorder %s34, 0
      %p253 = por %p251, %p252
      %s255 = sadd.s32 %s254, 1
      %p258 = scmp.eq.s32.totalorder %s28, 1
      %p259 = scmp.ne.s32.totalorder %s254, %s256
      %p260 = scmp.eq.s32.totalorder %s28, 0
      %p261 = por %p259, %p260
      %p262 = scmp.ne.s32.totalorder %s254, %s256
      %p263 = scmp.eq.s32.totalorder %s33, 1
      %p264 = por %p262, %p263
      %p265 = scmp.ne.s32.totalorder %s256, %s257
      %p266 = scmp.eq.s32.totalorder %s33, 0
      %p267 = por %p265, %p266
      %p268 = scmp.ne.s32.totalorder %s256, %s257
      %p269 = scmp.eq.s32.totalorder %s34, 1
      %p270 = por %p268, %p269
      %p272 = scmp.ne.s32.totalorder %s257, %s271
      %p273 = scmp.eq.s32.totalorder %s34, 0
      %p274 = por %p272, %p273
      %s276 = sadd.s32 %s275, 1
      %p279 = scmp.eq.s32.totalorder %s28, 1
      %p280 = scmp.ne.s32.totalorder %s275, %s277
      %p281 = scmp.eq.s32.totalorder %s28, 0
      %p282 = por %p280, %p281
      %p283 = scmp.ne.s32.totalorder %s275, %s277
      %p284 = scmp.eq.s32.totalorder %s33, 1
      %p285 = por %p283, %p284
      %p286 = scmp.ne.s32.totalorder %s277, %s278
      %p287 = scmp.eq.s32.totalorder %s33, 0
      %p288 = por %p286, %p287
      %p289 = scmp.ne.s32.totalorder %s277, %s278
      %p290 = scmp.eq.s32.totalorder %s34, 1
      %p291 = por %p289, %p290
      %p293 = scmp.ne.s32.totalorder %s278, %s292
      %p294 = scmp.eq.s32.totalorder %s34, 0
      %p295 = por %p293, %p294
      %s296 = ssub.s32 %s35, %s47
      %s297 = ssub.s32 %s36, %s43
      %s298 = sor.u32 %s296, %s297
      %p299 = scmp.eq.s32.totalorder %s298, 0
      %s301 = sadd.s32 %s300, 1
      %s302 = scalar_select %p299, %s300, %s301
      %p305 = pneg %p299
      %p306 = scmp.eq.s32.totalorder %s28, 1
      %p307 = por %p305, %p306
      %p308 = scmp.ne.s32.totalorder %s300, %s303
      %p309 = scmp.eq.s32.totalorder %s28, 0
      %p310 = por %p308, %p309
      %p311 = scmp.ne.s32.totalorder %s300, %s303
      %p312 = scmp.eq.s32.totalorder %s33, 1
      %p313 = por %p311, %p312
      %p314 = scmp.ne.s32.totalorder %s303, %s304
      %p315 = scmp.eq.s32.totalorder %s33, 0
      %p316 = por %p314, %p315
      %p317 = scmp.ne.s32.totalorder %s303, %s304
      %p318 = scmp.eq.s32.totalorder %s34, 1
      %p319 = por %p317, %p318
      %p321 = scmp.ne.s32.totalorder %s304, %s320
      %p322 = scmp.eq.s32.totalorder %s34, 0
      %p323 = por %p321, %p322
      %p324 = scmp.le.s32.totalorder 1, %s28
      %p325 = scmp.lt.s32.totalorder %s28, 3
      %p326 = pnand %p324, %p325
      %p327 = pneg %p326
      // Predicated region
      $region9: #{tpu_custom_call.1} parent=5 // pred_check
        _
      $region10: #{tpu_custom_call.1} parent=5 // pred_check_branch
        %329 = sbr.rel (%p326) target = $region12
      $region11: #{tpu_custom_call.1} parent=5 // pred_region
        %s330 = ssub.s32 %s28, 1
        // Predicated region
        $region13: #{tpu_custom_call.1} parent=11 // pred_check
          %p331 = pneg %p141
        $region14: #{tpu_custom_call.1} parent=11 // pred_check_branch
          %333 = sbr.rel (%p331) target = $region16
        $region15: #{tpu_custom_call.1} parent=11 // pred_region
          %s335 = ssub.s32 256, 256
          %336 = vsyncadd [#allocation9], %s335
          %s337 = sshll.u32 [#allocation8], 4
          %s338 = int_to_ptr.vmem [resolvable:$true] %s337
          %343 = dma.hbm_to_vmem [thread:$0]  %s3, 256, %s338, [#allocation9], 64, 64, 4
        $region16: #{tpu_custom_call.1} parent=11 // pred_fallthru
          _
        // Predicated region
        $region17: #{tpu_custom_call.1} parent=11 // pred_check
          %p344 = pneg %p162
        $region18: #{tpu_custom_call.1} parent=11 // pred_check_branch
          %346 = sbr.rel (%p344) target = $region20
        $region19: #{tpu_custom_call.1} parent=11 // pred_region
          _
        $region20: #{tpu_custom_call.1} parent=11 // pred_fallthru
          _
        // Predicated region
        $region21: #{tpu_custom_call.1} parent=11 // pred_check
          %p347 = pneg %p183
        $region22: #{tpu_custom_call.1} parent=11 // pred_check_branch
          %349 = sbr.rel (%p347) target = $region24
        $region23: #{tpu_custom_call.1} parent=11 // pred_region
          _
        $region24: #{tpu_custom_call.1} parent=11 // pred_fallthru
          _
        // Predicated region
        $region25: #{tpu_custom_call.1} parent=11 // pred_check
          %p350 = pneg %p204
        $region26: #{tpu_custom_call.1} parent=11 // pred_check_branch
          %352 = sbr.rel (%p350) target = $region28
        $region27: #{tpu_custom_call.1} parent=11 // pred_region
          _
        $region28: #{tpu_custom_call.1} parent=11 // pred_fallthru
          _
        // Predicated region
        $region29: #{tpu_custom_call.1} parent=11 // pred_check
          %p353 = pneg %p225
        $region30: #{tpu_custom_call.1} parent=11 // pred_check_branch
          %355 = sbr.rel (%p353) target = $region32
        $region31: #{tpu_custom_call.1} parent=11 // pred_region
          %s357 = ssub.s32 256, 256
          %358 = vsyncadd [#allocation9], %s357
          %s359 = sshll.u32 [#allocation10], 4
          %s360 = int_to_ptr.vmem [resolvable:$true] %s359
          %365 = dma.hbm_to_vmem [thread:$0]  %s7, 256, %s360, [#allocation9], 64, 64, 4
        $region32: #{tpu_custom_call.1} parent=11 // pred_fallthru
          _
        // Predicated region
        $region33: #{tpu_custom_call.1} parent=11 // pred_check
          %p366 = pneg %p246
        $region34: #{tpu_custom_call.1} parent=11 // pred_check_branch
          %368 = sbr.rel (%p366) target = $region36
        $region35: #{tpu_custom_call.1} parent=11 // pred_region
          %s370 = ssub.s32 16, 16
          %371 = vsyncadd [#allocation12], %s370
          %s373 = sshll.u32 [#allocation11], 4
          %s374 = int_to_ptr.vmem [resolvable:$true] %s373
          %376 = dma.hbm_to_vmem [thread:$0]  %s8, 16, %s374, [#allocation12]
        $region36: #{tpu_custom_call.1} parent=11 // pred_fallthru
          _
        // Predicated region
        $region37: #{tpu_custom_call.1} parent=11 // pred_check
          %p377 = pneg %p267
        $region38: #{tpu_custom_call.1} parent=11 // pred_check_branch
          %379 = sbr.rel (%p377) target = $region40
        $region39: #{tpu_custom_call.1} parent=11 // pred_region
          _
        $region40: #{tpu_custom_call.1} parent=11 // pred_fallthru
          _
        // Predicated region
        $region41: #{tpu_custom_call.1} parent=11 // pred_check
          %p380 = pneg %p288
        $region42: #{tpu_custom_call.1} parent=11 // pred_check_branch
          %382 = sbr.rel (%p380) target = $region44
        $region43: #{tpu_custom_call.1} parent=11 // pred_region
          _
        $region44: #{tpu_custom_call.1} parent=11 // pred_fallthru
          _
      $region12: #{tpu_custom_call.1} parent=5 // pred_fallthru
        _
      %p383 = scmp.lt.s32.totalorder %s28, 2
      // Predicated region
      $region45: #{tpu_custom_call.1} parent=5 // pred_check
        %p384 = pneg %p383
      $region46: #{tpu_custom_call.1} parent=5 // pred_check_branch
        %386 = sbr.rel (%p384) target = $region48
      $region47: #{tpu_custom_call.1} parent=5 // pred_region
        // Predicated region
        $region49: #{tpu_custom_call.1} parent=47 // pred_check
          %p387 = pneg %p62
        $region50: #{tpu_custom_call.1} parent=47 // pred_check_branch
          %389 = sbr.rel (%p387) target = $region52
        $region51: #{tpu_custom_call.1} parent=47 // pred_region
          %s390 = sand.u32 %s52, 1
          %s391 = scalar_lea.sflag [#allocation3], %s390
          %s392 = sand.u32 %s52, 1
          %s393 = smul.addr %s392, 8
          %s394 = scalar_lea.vmem [#allocation2], %s393
          %s396 = ssub.s32 128, 128
          %397 = vsyncadd %s391, %s396
          %s398 = sadd.s32 %s36, %s35
          %s399 = smul.addr %s398, 128
          %s400 = scalar_lea.hbm %s0, %s399
          %s402 = sshll.u32 %s394, 4
          %s403 = int_to_ptr.vmem [resolvable:$true] %s402
          %405 = dma.hbm_to_vmem [thread:$0]  %s400, 128, %s403, %s391
        $region52: #{tpu_custom_call.1} parent=47 // pred_fallthru
          _
        // Predicated region
        $region53: #{tpu_custom_call.1} parent=47 // pred_check
          %p406 = pneg %p88
        $region54: #{tpu_custom_call.1} parent=47 // pred_check_branch
          %408 = sbr.rel (%p406) target = $region56
        $region55: #{tpu_custom_call.1} parent=47 // pred_region
          %s409 = sand.u32 %s28, 1
          %s410 = scalar_lea.sflag [#allocation6], %s409
          %s411 = sand.u32 %s78, 1
          %s412 = smul.addr %s411, 8
          %s413 = scalar_lea.vmem [#allocation5], %s412
          %s415 = ssub.s32 128, 128
          %416 = vsyncadd %s410, %s415
          %s417 = smul.addr %s35, 128
          %s418 = scalar_lea.hbm %s1, %s417
          %s420 = sshll.u32 %s413, 4
          %s421 = int_to_ptr.vmem [resolvable:$true] %s420
          %423 = dma.hbm_to_vmem [thread:$0]  %s418, 128, %s421, %s410
        $region56: #{tpu_custom_call.1} parent=47 // pred_fallthru
          _
        // Predicated region
        $region57: #{tpu_custom_call.1} parent=47 // pred_check
          %p424 = pneg %p114
        $region58: #{tpu_custom_call.1} parent=47 // pred_check_branch
          %426 = sbr.rel (%p424) target = $region60
        $region59: #{tpu_custom_call.1} parent=47 // pred_region
          %s427 = sand.u32 %s28, 1
          %s428 = scalar_lea.sflag [#allocation6], %s427
          %s429 = sand.u32 %s104, 1
          %s430 = smul.addr %s429, 8
          %s431 = scalar_lea.vmem [#allocation7], %s430
          %s433 = ssub.s32 128, 128
          %434 = vsyncadd %s428, %s433
          %s435 = smul.addr %s35, 128
          %s436 = scalar_lea.hbm %s2, %s435
          %s438 = sshll.u32 %s431, 4
          %s439 = int_to_ptr.vmem [resolvable:$true] %s438
          %441 = dma.hbm_to_vmem [thread:$0]  %s436, 128, %s439, %s428
        $region60: #{tpu_custom_call.1} parent=47 // pred_fallthru
          _
      $region48: #{tpu_custom_call.1} parent=5 // pred_fallthru
        _
      %p442 = scmp.le.s32.totalorder 1, %s28
      %p443 = scmp.lt.s32.totalorder %s28, 3
      %p444 = pnand %p442, %p443
      %p445 = pneg %p444
      // Predicated region
      $region61: #{tpu_custom_call.1} parent=5 // pred_check
        _
      $region62: #{tpu_custom_call.1} parent=5 // pred_check_branch
        %447 = sbr.rel (%p444) target = $region64
      $region63: #{tpu_custom_call.1} parent=5 // pred_region
        %s448 = ssub.s32 %s28, 1
        %s449 = sand.u32 %s55, 1
        %s450 = scalar_lea.sflag [#allocation3], %s449
        %s451 = sand.u32 %s55, 1
        %s452 = smul.addr %s451, 8
        %s453 = scalar_lea.vmem [#allocation2], %s452
        // Predicated region
        $region65: #{tpu_custom_call.1} parent=63 // pred_check
          %p454 = pneg %p68
        $region66: #{tpu_custom_call.1} parent=63 // pred_check_branch
          %456 = sbr.rel (%p454) target = $region68
        $region67: #{tpu_custom_call.1} parent=63 // pred_region
          %457 = dma.done %s450, 128
        $region68: #{tpu_custom_call.1} parent=63 // pred_fallthru
          _
        %s458 = sand.u32 %s33, 1
        %s459 = scalar_lea.sflag [#allocation6], %s458
        %s460 = sand.u32 %s81, 1
        %s461 = smul.addr %s460, 8
        %s462 = scalar_lea.vmem [#allocation5], %s461
        // Predicated region
        $region69: #{tpu_custom_call.1} parent=63 // pred_check
          %p463 = pneg %p94
        $region70: #{tpu_custom_call.1} parent=63 // pred_check_branch
          %465 = sbr.rel (%p463) target = $region72
        $region71: #{tpu_custom_call.1} parent=63 // pred_region
          %466 = dma.done %s459, 128
        $region72: #{tpu_custom_call.1} parent=63 // pred_fallthru
          _
        %s467 = sand.u32 %s33, 1
        %s468 = scalar_lea.sflag [#allocation6], %s467
        %s469 = sand.u32 %s107, 1
        %s470 = smul.addr %s469, 8
        %s471 = scalar_lea.vmem [#allocation7], %s470
        // Predicated region
        $region73: #{tpu_custom_call.1} parent=63 // pred_check
          %p472 = pneg %p120
        $region74: #{tpu_custom_call.1} parent=63 // pred_check_branch
          %474 = sbr.rel (%p472) target = $region76
        $region75: #{tpu_custom_call.1} parent=63 // pred_region
          %475 = dma.done %s468, 128
        $region76: #{tpu_custom_call.1} parent=63 // pred_fallthru
          _
        // Predicated region
        $region77: #{tpu_custom_call.1} parent=63 // pred_check
          %p476 = pneg %p141
        $region78: #{tpu_custom_call.1} parent=63 // pred_check_branch
          %478 = sbr.rel (%p476) target = $region80
        $region79: #{tpu_custom_call.1} parent=63 // pred_region
          %479 = dma.done [#allocation9], 256
        $region80: #{tpu_custom_call.1} parent=63 // pred_fallthru
          _
        // Predicated region
        $region81: #{tpu_custom_call.1} parent=63 // pred_check
          %p480 = pneg %p225
        $region82: #{tpu_custom_call.1} parent=63 // pred_check_branch
          %482 = sbr.rel (%p480) target = $region84
        $region83: #{tpu_custom_call.1} parent=63 // pred_region
          %483 = dma.done [#allocation9], 256
        $region84: #{tpu_custom_call.1} parent=63 // pred_fallthru
          _
        // Predicated region
        $region85: #{tpu_custom_call.1} parent=63 // pred_check
          %p484 = pneg %p246
        $region86: #{tpu_custom_call.1} parent=63 // pred_check_branch
          %486 = sbr.rel (%p484) target = $region88
        $region87: #{tpu_custom_call.1} parent=63 // pred_region
          %487 = dma.done [#allocation12], 16
        $region88: #{tpu_custom_call.1} parent=63 // pred_fallthru
          _
        %s488 = sand.u32 %s55, 1
        %s489 = scalar_lea.sflag [#allocation3], %s488
        %s490 = sand.u32 %s55, 1
        %s491 = smul.addr %s490, 8
        %s492 = scalar_lea.vmem [#allocation2], %s491
        %p493 = pneg %p68
        %p494 = pneg %p65
        %s495 = sand.u32 %s33, 1
        %s496 = scalar_lea.sflag [#allocation6], %s495
        %s497 = sand.u32 %s81, 1
        %s498 = smul.addr %s497, 8
        %s499 = scalar_lea.vmem [#allocation5], %s498
        %p500 = pneg %p94
        %p501 = pneg %p91
        %s502 = sand.u32 %s33, 1
        %s503 = scalar_lea.sflag [#allocation6], %s502
        %s504 = sand.u32 %s107, 1
        %s505 = smul.addr %s504, 8
        %s506 = scalar_lea.vmem [#allocation7], %s505
        %p507 = pneg %p120
        %p508 = pneg %p117
        %p509 = pneg %p141
        %p510 = pneg %p138
        %p511 = pneg %p162
        %p512 = pneg %p159
        %p513 = pneg %p183
        %p514 = pneg %p180
        %p515 = pneg %p204
        %p516 = pneg %p201
        %p517 = pneg %p225
        %p518 = pneg %p222
        %p519 = pneg %p246
        %p520 = pneg %p243
        %p521 = pneg %p267
        %p522 = pneg %p264
        %p523 = pneg %p288
        %p524 = pneg %p285
        %p525 = pneg %p316
        %p526 = pneg %p313
        %s527 = sand.u32 %s303, 1
        %s528 = scalar_lea.sflag [#allocation4], %s527
        %s529 = sand.u32 %s303, 1
        %s530 = smul.addr %s529, 8
        %s531 = scalar_lea.vmem [#allocation13], %s530
        %v533 = vld [vmem:[%s453] sm:$0xff]
        %v534 = vpack.c.bf16 %v533, %v533
        %v535 = vld [vmem:[%s462] sm:$0xff]
        %v536 = vpack.c.bf16 %v535, %v535
        %v537 = vld [vmem:[%s471] sm:$0xff]
        %v538 = vpack.c.bf16 %v537, %v537
        %v539 = vld [vmem:[#allocation8] sm:$0xf]
        %v540 = vld [vmem:[#allocation8 + $0x4] sm:$0xf]
        %v541 = vld [vmem:[#allocation8 + $0x8] sm:$0xf]
        %v542 = vld [vmem:[#allocation8 + $0xc] sm:$0xf]
        %v543 = vld [vmem:[%s4] sm:$0x1]
        %v545 = vlaneseq
        %v546 = vshrl.u32 %v545, 7
        %v547 = vsub.s32 0, %v546
        %v548 = vrot.slane %v543, %v547
        %v554 = vunpack.c.l.b16 %v539
        %v555 = vunpack.c.l.b16 %v540
        %v556 = vunpack.c.l.b16 %v541
        %v557 = vunpack.c.l.b16 %v542
        %v558 = vpack.c.b16 %v555, %v554
        %v559 = vpack.c.b16 %v557, %v556
        %vm562 = vcmask 261120
        %v564 = vsel %vm562, %v534, 0
        %566 = vmatprep.subr.bf16.mxu0 0
        %567 = vmatpush1.bf16.msra.mxu0 %v558
        %568 = vmatprep.subr.bf16.mxu0 0
        %569 = vmatpush1.bf16.msra.mxu0 %v559
        %570 = vmatprep.subr.bf16.mxu0 0
        %571 = vmatpush1.bf16.msra.mxu0 0
        %572 = vmatprep.subr.bf16.mxu0 0
        %573 = vmatpush1.bf16.msra.mxu0 0
        %574 = vmatprep.subr.bf16.mxu0 0
        %575 = vmatpush1.bf16.msra.mxu0 0
        %576 = vmatprep.subr.bf16.mxu0 0
        %577 = vmatpush1.bf16.msra.mxu0 0
        %578 = vmatprep.subr.bf16.mxu0 0
        %579 = vmatpush1.bf16.msra.mxu0 0
        %580 = vmatprep.subr.bf16.mxu0 0
        %581 = vmatpush1.bf16.msra.mxu0 0
        %582 = vmatprep.subr.bf16.mxu0 0
        %583 = vmatpush1.bf16.msra.mxu0 0
        %584 = vmatprep.subr.bf16.mxu0 0
        %585 = vmatpush1.bf16.msra.mxu0 0
        %586 = vmatprep.subr.bf16.mxu0 0
        %587 = vmatpush1.bf16.msra.mxu0 0
        %588 = vmatprep.subr.bf16.mxu0 0
        %589 = vmatpush1.bf16.msra.mxu0 0
        %590 = vmatprep.subr.bf16.mxu0 0
        %591 = vmatpush1.bf16.msra.mxu0 0
        %592 = vmatprep.subr.bf16.mxu0 0
        %593 = vmatpush1.bf16.msra.mxu0 0
        %594 = vmatprep.subr.bf16.mxu0 0
        %595 = vmatpush1.bf16.msra.mxu0 0
        %596 = vmatprep.subr.bf16.mxu0 0
        %597 = vmatpush1.bf16.msra.mxu0 0
        %598 = vmatprep.mubr.bf16.mxu0 0
        %599 = vmatmul.mubr.bf16.gmra.mrb[0].mxu0 %v564
        %v600 = vpop.f32.mrb[0].mxu0
        %v601 = vadd.f32 %v548, %v600
        %v602 = vpop.f32.mrb[0].mxu0
        %v603 = vpop.f32.mrb[0].mxu0
        %v604 = vpop.f32.mrb[0].mxu0
        %605 = vdwg.mxu0
        %v606 = vld [vmem:[%s5] sm:$0xf]
        %v607 = vld [vmem:[%s5 + $0x4] sm:$0xf]
        %v608 = vld [vmem:[%s5 + $0x8] sm:$0xf]
        %v609 = vld [vmem:[%s5 + $0xc] sm:$0xf]
        %v610 = vld [vmem:[%s6] sm:$0x1]
        %v612 = vlaneseq
        %v613 = vshrl.u32 %v612, 7
        %v614 = vsub.s32 0, %v613
        %v615 = vrot.slane %v610, %v614
        %v621 = vunpack.c.l.b16 %v606
        %v622 = vunpack.c.l.b16 %v607
        %v623 = vunpack.c.l.b16 %v608
        %v624 = vunpack.c.l.b16 %v609
        %v625 = vpack.c.b16 %v622, %v621
        %v626 = vpack.c.b16 %v624, %v623
        %v630 = vsel %vm562, %v536, 0
        %632 = vmatprep.subr.bf16.mxu0 0
        %633 = vmatpush1.bf16.msra.mxu0 %v625
        %634 = vmatprep.subr.bf16.mxu0 0
        %635 = vmatpush1.bf16.msra.mxu0 %v626
        %636 = vmatprep.subr.bf16.mxu0 0
        %637 = vmatpush1.bf16.msra.mxu0 0
        %638 = vmatprep.subr.bf16.mxu0 0
        %639 = vmatpush1.bf16.msra.mxu0 0
        %640 = vmatprep.subr.bf16.mxu0 0
        %641 = vmatpush1.bf16.msra.mxu0 0
        %642 = vmatprep.subr.bf16.mxu0 0
        %643 = vmatpush1.bf16.msra.mxu0 0
        %644 = vmatprep.subr.bf16.mxu0 0
        %645 = vmatpush1.bf16.msra.mxu0 0
        %646 = vmatprep.subr.bf16.mxu0 0
        %647 = vmatpush1.bf16.msra.mxu0 0
        %648 = vmatprep.subr.bf16.mxu0 0
        %649 = vmatpush1.bf16.msra.mxu0 0
        %650 = vmatprep.subr.bf16.mxu0 0
        %651 = vmatpush1.bf16.msra.mxu0 0
        %652 = vmatprep.subr.bf16.mxu0 0
        %653 = vmatpush1.bf16.msra.mxu0 0
        %654 = vmatprep.subr.bf16.mxu0 0
        %655 = vmatpush1.bf16.msra.mxu0 0
        %656 = vmatprep.subr.bf16.mxu0 0
        %657 = vmatpush1.bf16.msra.mxu0 0
        %658 = vmatprep.subr.bf16.mxu0 0
        %659 = vmatpush1.bf16.msra.mxu0 0
        %660 = vmatprep.subr.bf16.mxu0 0
        %661 = vmatpush1.bf16.msra.mxu0 0
        %662 = vmatprep.subr.bf16.mxu0 0
        %663 = vmatpush1.bf16.msra.mxu0 0
        %664 = vmatprep.mubr.bf16.mxu0 0
        %665 = vmatmul.mubr.bf16.gmra.mrb[0].mxu0 %v630
        %v666 = vpop.f32.mrb[0].mxu0
        %v667 = vadd.f32 %v615, %v666
        %v668 = vpop.f32.mrb[0].mxu0
        %v669 = vpop.f32.mrb[0].mxu0
        %v670 = vpop.f32.mrb[0].mxu0
        %671 = vdwg.mxu0
        %v672 = vld [vmem:[#allocation10] sm:$0xf]
        %v673 = vld [vmem:[#allocation10 + $0x4] sm:$0xf]
        %v674 = vld [vmem:[#allocation10 + $0x8] sm:$0xf]
        %v675 = vld [vmem:[#allocation10 + $0xc] sm:$0xf]
        %v676 = vld [vmem:[#allocation11] sm:$0x1]
        %v678 = vlaneseq
        %v679 = vshrl.u32 %v678, 7
        %v680 = vsub.s32 0, %v679
        %v681 = vrot.slane %v676, %v680
        %v687 = vunpack.c.l.b16 %v672
        %v688 = vunpack.c.l.b16 %v673
        %v689 = vunpack.c.l.b16 %v674
        %v690 = vunpack.c.l.b16 %v675
        %v691 = vpack.c.b16 %v688, %v687
        %v692 = vpack.c.b16 %v690, %v689
        %v696 = vsel %vm562, %v538, 0
        %698 = vmatprep.subr.bf16.mxu0 0
        %699 = vmatpush1.bf16.msra.mxu0 %v691
        %700 = vmatprep.subr.bf16.mxu0 0
        %701 = vmatpush1.bf16.msra.mxu0 %v692
        %702 = vmatprep.subr.bf16.mxu0 0
        %703 = vmatpush1.bf16.msra.mxu0 0
        %704 = vmatprep.subr.bf16.mxu0 0
        %705 = vmatpush1.bf16.msra.mxu0 0
        %706 = vmatprep.subr.bf16.mxu0 0
        %707 = vmatpush1.bf16.msra.mxu0 0
        %708 = vmatprep.subr.bf16.mxu0 0
        %709 = vmatpush1.bf16.msra.mxu0 0
        %710 = vmatprep.subr.bf16.mxu0 0
        %711 = vmatpush1.bf16.msra.mxu0 0
        %712 = vmatprep.subr.bf16.mxu0 0
        %713 = vmatpush1.bf16.msra.mxu0 0
        %714 = vmatprep.subr.bf16.mxu0 0
        %715 = vmatpush1.bf16.msra.mxu0 0
        %716 = vmatprep.subr.bf16.mxu0 0
        %717 = vmatpush1.bf16.msra.mxu0 0
        %718 = vmatprep.subr.bf16.mxu0 0
        %719 = vmatpush1.bf16.msra.mxu0 0
        %720 = vmatprep.subr.bf16.mxu0 0
        %721 = vmatpush1.bf16.msra.mxu0 0
        %722 = vmatprep.subr.bf16.mxu0 0
        %723 = vmatpush1.bf16.msra.mxu0 0
        %724 = vmatprep.subr.bf16.mxu0 0
        %725 = vmatpush1.bf16.msra.mxu0 0
        %726 = vmatprep.subr.bf16.mxu0 0
        %727 = vmatpush1.bf16.msra.mxu0 0
        %728 = vmatprep.subr.bf16.mxu0 0
        %729 = vmatpush1.bf16.msra.mxu0 0
        %730 = vmatprep.mubr.bf16.mxu0 0
        %731 = vmatmul.mubr.bf16.gmra.mrb[0].mxu0 %v696
        %v732 = vpop.f32.mrb[0].mxu0
        %v733 = vadd.f32 %v681, %v732
        %v734 = vpop.f32.mrb[0].mxu0
        %v735 = vpop.f32.mrb[0].mxu0
        %v736 = vpop.f32.mrb[0].mxu0
        %737 = vdwg.mxu0
        %v738 = vmul.f32 %v601, 0.35355338
        %740 = vrot.lane.b32.xlu0 %v738, 120
        %v741 = vpop.permute.xlu0 %740
        %743 = vrot.lane.b32.xlu0 %v738, 112
        %v744 = vpop.permute.xlu0 %743
        %746 = vrot.lane.b32.xlu0 %v738, 104
        %v747 = vpop.permute.xlu0 %746
        %v749 = vcombine.low %v738, %v744
        %v750 = vcombine.high %v738, %v744
        %v752 = vunpack.c.l.s4 1983009808
        %v753 = vunpack.c.0.s8 %v752
        %v754 = vlaneseq
        %v755 = vshrl.u32 %v754, 7
        %v756 = vsub.s32 %v753, %v755
        %v757 = vrot.slane %v749, %v756
        %v759 = vunpack.c.l.s4 1983009808
        %v760 = vunpack.c.0.s8 %v759
        %v761 = vlaneseq
        %v762 = vshrl.u32 %v761, 7
        %v763 = vsub.s32 %v760, %v762
        %v764 = vrot.slane %v750, %v763
        %v765 = vcombine.low %v741, %v747
        %v766 = vcombine.high %v741, %v747
        %v768 = vunpack.c.l.s4 1983009808
        %v769 = vunpack.c.0.s8 %v768
        %v770 = vlaneseq
        %v771 = vshrl.u32 %v770, 7
        %v772 = vsub.s32 %v769, %v771
        %v773 = vrot.slane %v765, %v772
        %v775 = vunpack.c.l.s4 1983009808
        %v776 = vunpack.c.0.s8 %v775
        %v777 = vlaneseq
        %v778 = vshrl.u32 %v777, 7
        %v779 = vsub.s32 %v776, %v778
        %v780 = vrot.slane %v766, %v779
        %v781 = vcombine.low %v757, %v773
        %v782 = vcombine.high %v757, %v773
        %v784 = vunpack.c.l.s4 1934713408
        %v785 = vunpack.c.0.s8 %v784
        %v786 = vlaneseq
        %v787 = vshrl.u32 %v786, 7
        %v788 = vsub.s32 %v785, %v787
        %v789 = vrot.slane %v781, %v788
        %v791 = vunpack.c.l.s4 1934713408
        %v792 = vunpack.c.0.s8 %v791
        %v793 = vlaneseq
        %v794 = vshrl.u32 %v793, 7
        %v795 = vsub.s32 %v792, %v794
        %v796 = vrot.slane %v782, %v795
        %v797 = vcombine.low %v764, %v780
        %v798 = vcombine.high %v764, %v780
        %v800 = vunpack.c.l.s4 1934713408
        %v801 = vunpack.c.0.s8 %v800
        %v802 = vlaneseq
        %v803 = vshrl.u32 %v802, 7
        %v804 = vsub.s32 %v801, %v803
        %v805 = vrot.slane %v797, %v804
        %v807 = vunpack.c.l.s4 1934713408
        %v808 = vunpack.c.0.s8 %v807
        %v809 = vlaneseq
        %v810 = vshrl.u32 %v809, 7
        %v811 = vsub.s32 %v808, %v810
        %v812 = vrot.slane %v798, %v811
        %v813 = vcombine.high %v789, 0.0
        %v814 = vcombine.high %v796, 0.0
        %v815 = vcombine.high %v805, 0.0
        %v816 = vcombine.high %v812, 0.0
        %v817 = vcombine.low %v789, %v796
        %v819 = vunpack.c.l.s4 1983009808
        %v820 = vunpack.c.0.s8 %v819
        %v821 = vlaneseq
        %v822 = vshrl.u32 %v821, 7
        %v823 = vsub.s32 %v820, %v822
        %v824 = vrot.slane %v817, %v823
        %v825 = vcombine.low %v813, %v814
        %v827 = vunpack.c.l.s4 1983009808
        %v828 = vunpack.c.0.s8 %v827
        %v829 = vlaneseq
        %v830 = vshrl.u32 %v829, 7
        %v831 = vsub.s32 %v828, %v830
        %v832 = vrot.slane %v825, %v831
        %v833 = vcombine.low %v805, %v812
        %v835 = vunpack.c.l.s4 1983009808
        %v836 = vunpack.c.0.s8 %v835
        %v837 = vlaneseq
        %v838 = vshrl.u32 %v837, 7
        %v839 = vsub.s32 %v836, %v838
        %v840 = vrot.slane %v833, %v839
        %v841 = vcombine.low %v815, %v816
        %v843 = vunpack.c.l.s4 1983009808
        %v844 = vunpack.c.0.s8 %v843
        %v845 = vlaneseq
        %v846 = vshrl.u32 %v845, 7
        %v847 = vsub.s32 %v844, %v846
        %v848 = vrot.slane %v841, %v847
        %v849 = vcombine.low %v824, %v832
        %v850 = vcombine.high %v824, %v832
        %v852 = vunpack.c.l.s4 1934713408
        %v853 = vunpack.c.0.s8 %v852
        %v854 = vlaneseq
        %v855 = vshrl.u32 %v854, 7
        %v856 = vsub.s32 %v853, %v855
        %v857 = vrot.slane %v849, %v856
        %v859 = vunpack.c.l.s4 1934713408
        %v860 = vunpack.c.0.s8 %v859
        %v861 = vlaneseq
        %v862 = vshrl.u32 %v861, 7
        %v863 = vsub.s32 %v860, %v862
        %v864 = vrot.slane %v850, %v863
        %v865 = vcombine.low %v840, %v848
        %v866 = vcombine.high %v840, %v848
        %v868 = vunpack.c.l.s4 1934713408
        %v869 = vunpack.c.0.s8 %v868
        %v870 = vlaneseq
        %v871 = vshrl.u32 %v870, 7
        %v872 = vsub.s32 %v869, %v871
        %v873 = vrot.slane %v865, %v872
        %v875 = vunpack.c.l.s4 1934713408
        %v876 = vunpack.c.0.s8 %v875
        %v877 = vlaneseq
        %v878 = vshrl.u32 %v877, 7
        %v879 = vsub.s32 %v876, %v878
        %v880 = vrot.slane %v866, %v879
        %v881 = vcombine.low %v857, %v873
        %v882 = vcombine.high %v857, %v873
        %v883 = vcombine.low %v864, %v880
        %v884 = vcombine.high %v864, %v880
        %v885 = vpack.c.bf16 %v881, %v881
        %v886 = vpack.c.bf16 %v882, %v882
        %v887 = vpack.c.bf16 %v883, %v883
        %v888 = vpack.c.bf16 %v884, %v884
        %890 = vrot.lane.b32.xlu0 %v667, 120
        %v891 = vpop.permute.xlu0 %890
        %893 = vrot.lane.b32.xlu0 %v667, 112
        %v894 = vpop.permute.xlu0 %893
        %896 = vrot.lane.b32.xlu0 %v667, 104
        %v897 = vpop.permute.xlu0 %896
        %v899 = vcombine.low %v667, %v894
        %v900 = vcombine.high %v667, %v894
        %v902 = vunpack.c.l.s4 1983009808
        %v903 = vunpack.c.0.s8 %v902
        %v904 = vlaneseq
        %v905 = vshrl.u32 %v904, 7
        %v906 = vsub.s32 %v903, %v905
        %v907 = vrot.slane %v899, %v906
        %v909 = vunpack.c.l.s4 1983009808
        %v910 = vunpack.c.0.s8 %v909
        %v911 = vlaneseq
        %v912 = vshrl.u32 %v911, 7
        %v913 = vsub.s32 %v910, %v912
        %v914 = vrot.slane %v900, %v913
        %v915 = vcombine.low %v891, %v897
        %v916 = vcombine.high %v891, %v897
        %v918 = vunpack.c.l.s4 1983009808
        %v919 = vunpack.c.0.s8 %v918
        %v920 = vlaneseq
        %v921 = vshrl.u32 %v920, 7
        %v922 = vsub.s32 %v919, %v921
        %v923 = vrot.slane %v915, %v922
        %v925 = vunpack.c.l.s4 1983009808
        %v926 = vunpack.c.0.s8 %v925
        %v927 = vlaneseq
        %v928 = vshrl.u32 %v927, 7
        %v929 = vsub.s32 %v926, %v928
        %v930 = vrot.slane %v916, %v929
        %v931 = vcombine.low %v907, %v923
        %v932 = vcombine.high %v907, %v923
        %v934 = vunpack.c.l.s4 1934713408
        %v935 = vunpack.c.0.s8 %v934
        %v936 = vlaneseq
        %v937 = vshrl.u32 %v936, 7
        %v938 = vsub.s32 %v935, %v937
        %v939 = vrot.slane %v931, %v938
        %v941 = vunpack.c.l.s4 1934713408
        %v942 = vunpack.c.0.s8 %v941
        %v943 = vlaneseq
        %v944 = vshrl.u32 %v943, 7
        %v945 = vsub.s32 %v942, %v944
        %v946 = vrot.slane %v932, %v945
        %v947 = vcombine.low %v914, %v930
        %v948 = vcombine.high %v914, %v930
        %v950 = vunpack.c.l.s4 1934713408
        %v951 = vunpack.c.0.s8 %v950
        %v952 = vlaneseq
        %v953 = vshrl.u32 %v952, 7
        %v954 = vsub.s32 %v951, %v953
        %v955 = vrot.slane %v947, %v954
        %v957 = vunpack.c.l.s4 1934713408
        %v958 = vunpack.c.0.s8 %v957
        %v959 = vlaneseq
        %v960 = vshrl.u32 %v959, 7
        %v961 = vsub.s32 %v958, %v960
        %v962 = vrot.slane %v948, %v961
        %v963 = vcombine.high %v939, 0.0
        %v964 = vcombine.high %v946, 0.0
        %v965 = vcombine.high %v955, 0.0
        %v966 = vcombine.high %v962, 0.0
        %v967 = vcombine.low %v939, %v946
        %v969 = vunpack.c.l.s4 1983009808
        %v970 = vunpack.c.0.s8 %v969
        %v971 = vlaneseq
        %v972 = vshrl.u32 %v971, 7
        %v973 = vsub.s32 %v970, %v972
        %v974 = vrot.slane %v967, %v973
        %v975 = vcombine.low %v963, %v964
        %v977 = vunpack.c.l.s4 1983009808
        %v978 = vunpack.c.0.s8 %v977
        %v979 = vlaneseq
        %v980 = vshrl.u32 %v979, 7
        %v981 = vsub.s32 %v978, %v980
        %v982 = vrot.slane %v975, %v981
        %v983 = vcombine.low %v955, %v962
        %v985 = vunpack.c.l.s4 1983009808
        %v986 = vunpack.c.0.s8 %v985
        %v987 = vlaneseq
        %v988 = vshrl.u32 %v987, 7
        %v989 = vsub.s32 %v986, %v988
        %v990 = vrot.slane %v983, %v989
        %v991 = vcombine.low %v965, %v966
        %v993 = vunpack.c.l.s4 1983009808
        %v994 = vunpack.c.0.s8 %v993
        %v995 = vlaneseq
        %v996 = vshrl.u32 %v995, 7
        %v997 = vsub.s32 %v994, %v996
        %v998 = vrot.slane %v991, %v997
        %v999 = vcombine.low %v974, %v982
        %v1000 = vcombine.high %v974, %v982
        %v1002 = vunpack.c.l.s4 1934713408
        %v1003 = vunpack.c.0.s8 %v1002
        %v1004 = vlaneseq
        %v1005 = vshrl.u32 %v1004, 7
        %v1006 = vsub.s32 %v1003, %v1005
        %v1007 = vrot.slane %v999, %v1006
        %v1009 = vunpack.c.l.s4 1934713408
        %v1010 = vunpack.c.0.s8 %v1009
        %v1011 = vlaneseq
        %v1012 = vshrl.u32 %v1011, 7
        %v1013 = vsub.s32 %v1010, %v1012
        %v1014 = vrot.slane %v1000, %v1013
        %v1015 = vcombine.low %v990, %v998
        %v1016 = vcombine.high %v990, %v998
        %v1018 = vunpack.c.l.s4 1934713408
        %v1019 = vunpack.c.0.s8 %v1018
        %v1020 = vlaneseq
        %v1021 = vshrl.u32 %v1020, 7
        %v1022 = vsub.s32 %v1019, %v1021
        %v1023 = vrot.slane %v1015, %v1022
        %v1025 = vunpack.c.l.s4 1934713408
        %v1026 = vunpack.c.0.s8 %v1025
        %v1027 = vlaneseq
        %v1028 = vshrl.u32 %v1027, 7
        %v1029 = vsub.s32 %v1026, %v1028
        %v1030 = vrot.slane %v1016, %v1029
        %v1031 = vcombine.low %v1007, %v1023
        %v1032 = vcombine.high %v1007, %v1023
        %v1033 = vcombine.low %v1014, %v1030
        %v1034 = vcombine.high %v1014, %v1030
        %v1035 = vpack.c.bf16 %v1031, %v1031
        %v1036 = vpack.c.bf16 %v1032, %v1032
        %v1037 = vpack.c.bf16 %v1033, %v1033
        %v1038 = vpack.c.bf16 %v1034, %v1034
        %1040 = vrot.lane.b32.xlu0 %v733, 120
        %v1041 = vpop.permute.xlu0 %1040
        %1043 = vrot.lane.b32.xlu0 %v733, 112
        %v1044 = vpop.permute.xlu0 %1043
        %1046 = vrot.lane.b32.xlu0 %v733, 104
        %v1047 = vpop.permute.xlu0 %1046
        %v1049 = vcombine.low %v733, %v1044
        %v1050 = vcombine.high %v733, %v1044
        %v1052 = vunpack.c.l.s4 1983009808
        %v1053 = vunpack.c.0.s8 %v1052
        %v1054 = vlaneseq
        %v1055 = vshrl.u32 %v1054, 7
        %v1056 = vsub.s32 %v1053, %v1055
        %v1057 = vrot.slane %v1049, %v1056
        %v1059 = vunpack.c.l.s4 1983009808
        %v1060 = vunpack.c.0.s8 %v1059
        %v1061 = vlaneseq
        %v1062 = vshrl.u32 %v1061, 7
        %v1063 = vsub.s32 %v1060, %v1062
        %v1064 = vrot.slane %v1050, %v1063
        %v1065 = vcombine.low %v1041, %v1047
        %v1066 = vcombine.high %v1041, %v1047
        %v1068 = vunpack.c.l.s4 1983009808
        %v1069 = vunpack.c.0.s8 %v1068
        %v1070 = vlaneseq
        %v1071 = vshrl.u32 %v1070, 7
        %v1072 = vsub.s32 %v1069, %v1071
        %v1073 = vrot.slane %v1065, %v1072
        %v1075 = vunpack.c.l.s4 1983009808
        %v1076 = vunpack.c.0.s8 %v1075
        %v1077 = vlaneseq
        %v1078 = vshrl.u32 %v1077, 7
        %v1079 = vsub.s32 %v1076, %v1078
        %v1080 = vrot.slane %v1066, %v1079
        %v1081 = vcombine.low %v1057, %v1073
        %v1082 = vcombine.high %v1057, %v1073
        %v1084 = vunpack.c.l.s4 1934713408
        %v1085 = vunpack.c.0.s8 %v1084
        %v1086 = vlaneseq
        %v1087 = vshrl.u32 %v1086, 7
        %v1088 = vsub.s32 %v1085, %v1087
        %v1089 = vrot.slane %v1081, %v1088
        %v1091 = vunpack.c.l.s4 1934713408
        %v1092 = vunpack.c.0.s8 %v1091
        %v1093 = vlaneseq
        %v1094 = vshrl.u32 %v1093, 7
        %v1095 = vsub.s32 %v1092, %v1094
        %v1096 = vrot.slane %v1082, %v1095
        %v1097 = vcombine.low %v1064, %v1080
        %v1098 = vcombine.high %v1064, %v1080
        %v1100 = vunpack.c.l.s4 1934713408
        %v1101 = vunpack.c.0.s8 %v1100
        %v1102 = vlaneseq
        %v1103 = vshrl.u32 %v1102, 7
        %v1104 = vsub.s32 %v1101, %v1103
        %v1105 = vrot.slane %v1097, %v1104
        %v1107 = vunpack.c.l.s4 1934713408
        %v1108 = vunpack.c.0.s8 %v1107
        %v1109 = vlaneseq
        %v1110 = vshrl.u32 %v1109, 7
        %v1111 = vsub.s32 %v1108, %v1110
        %v1112 = vrot.slane %v1098, %v1111
        %v1113 = vcombine.high %v1089, 0.0
        %v1114 = vcombine.high %v1096, 0.0
        %v1115 = vcombine.high %v1105, 0.0
        %v1116 = vcombine.high %v1112, 0.0
        %v1117 = vcombine.low %v1089, %v1096
        %v1119 = vunpack.c.l.s4 1983009808
        %v1120 = vunpack.c.0.s8 %v1119
        %v1121 = vlaneseq
        %v1122 = vshrl.u32 %v1121, 7
        %v1123 = vsub.s32 %v1120, %v1122
        %v1124 = vrot.slane %v1117, %v1123
        %v1125 = vcombine.low %v1113, %v1114
        %v1127 = vunpack.c.l.s4 1983009808
        %v1128 = vunpack.c.0.s8 %v1127
        %v1129 = vlaneseq
        %v1130 = vshrl.u32 %v1129, 7
        %v1131 = vsub.s32 %v1128, %v1130
        %v1132 = vrot.slane %v1125, %v1131
        %v1133 = vcombine.low %v1105, %v1112
        %v1135 = vunpack.c.l.s4 1983009808
        %v1136 = vunpack.c.0.s8 %v1135
        %v1137 = vlaneseq
        %v1138 = vshrl.u32 %v1137, 7
        %v1139 = vsub.s32 %v1136, %v1138
        %v1140 = vrot.slane %v1133, %v1139
        %v1141 = vcombine.low %v1115, %v1116
        %v1143 = vunpack.c.l.s4 1983009808
        %v1144 = vunpack.c.0.s8 %v1143
        %v1145 = vlaneseq
        %v1146 = vshrl.u32 %v1145, 7
        %v1147 = vsub.s32 %v1144, %v1146
        %v1148 = vrot.slane %v1141, %v1147
        %v1149 = vcombine.low %v1124, %v1132
        %v1150 = vcombine.high %v1124, %v1132
        %v1152 = vunpack.c.l.s4 1934713408
        %v1153 = vunpack.c.0.s8 %v1152
        %v1154 = vlaneseq
        %v1155 = vshrl.u32 %v1154, 7
        %v1156 = vsub.s32 %v1153, %v1155
        %v1157 = vrot.slane %v1149, %v1156
        %v1159 = vunpack.c.l.s4 1934713408
        %v1160 = vunpack.c.0.s8 %v1159
        %v1161 = vlaneseq
        %v1162 = vshrl.u32 %v1161, 7
        %v1163 = vsub.s32 %v1160, %v1162
        %v1164 = vrot.slane %v1150, %v1163
        %v1165 = vcombine.low %v1140, %v1148
        %v1166 = vcombine.high %v1140, %v1148
        %v1168 = vunpack.c.l.s4 1934713408
        %v1169 = vunpack.c.0.s8 %v1168
        %v1170 = vlaneseq
        %v1171 = vshrl.u32 %v1170, 7
        %v1172 = vsub.s32 %v1169, %v1171
        %v1173 = vrot.slane %v1165, %v1172
        %v1175 = vunpack.c.l.s4 1934713408
        %v1176 = vunpack.c.0.s8 %v1175
        %v1177 = vlaneseq
        %v1178 = vshrl.u32 %v1177, 7
        %v1179 = vsub.s32 %v1176, %v1178
        %v1180 = vrot.slane %v1166, %v1179
        %v1181 = vcombine.low %v1157, %v1173
        %v1182 = vcombine.high %v1157, %v1173
        %v1183 = vcombine.low %v1164, %v1180
        %v1184 = vcombine.high %v1164, %v1180
        %v1185 = vpack.c.bf16 %v1181, %v1181
        %v1186 = vpack.c.bf16 %v1182, %v1182
        %v1187 = vpack.c.bf16 %v1183, %v1183
        %v1188 = vpack.c.bf16 %v1184, %v1184
        %vm1189 = vcmask 64512
        %v1191 = vsel %vm1189, %v885, 0
        %v1194 = vsel %vm1189, %v1035, 0
        %1196 = vmatprep.subr.bf16.mxu0 0
        %1197 = vmatpush1.bf16.xpose.msra.mxu0 %v1194
        %1198 = vmatprep.subr.bf16.mxu0 0
        %1199 = vmatpush1.bf16.xpose.msra.mxu0 0
        %1200 = vmatprep.subr.bf16.mxu0 0
        %1201 = vmatpush1.bf16.xpose.msra.mxu0 0
        %1202 = vmatprep.subr.bf16.mxu0 0
        %1203 = vmatpush1.bf16.xpose.msra.mxu0 0
        %1204 = vmatprep.subr.bf16.mxu0 0
        %1205 = vmatpush1.bf16.xpose.msra.mxu0 0
        %1206 = vmatprep.subr.bf16.mxu0 0
        %1207 = vmatpush1.bf16.xpose.msra.mxu0 0
        %1208 = vmatprep.subr.bf16.mxu0 0
        %1209 = vmatpush1.bf16.xpose.msra.mxu0 0
        %1210 = vmatprep.subr.bf16.mxu0 0
        %1211 = vmatpush1.bf16.xpose.msra.mxu0 0
        %1212 = vmatprep.subr.bf16.mxu0 0
        %1213 = vmatpush1.bf16.xpose.msra.mxu0 0
        %1214 = vmatprep.subr.bf16.mxu0 0
        %1215 = vmatpush1.bf16.xpose.msra.mxu0 0
        %1216 = vmatprep.subr.bf16.mxu0 0
        %1217 = vmatpush1.bf16.xpose.msra.mxu0 0
        %1218 = vmatprep.subr.bf16.mxu0 0
        %1219 = vmatpush1.bf16.xpose.msra.mxu0 0
        %1220 = vmatprep.subr.bf16.mxu0 0
        %1221 = vmatpush1.bf16.xpose.msra.mxu0 0
        %1222 = vmatprep.subr.bf16.mxu0 0
        %1223 = vmatpush1.bf16.xpose.msra.mxu0 0
        %1224 = vmatprep.subr.bf16.mxu0 0
        %1225 = vmatpush1.bf16.xpose.msra.mxu0 0
        %1226 = vmatprep.subr.bf16.mxu0 0
        %1227 = vmatpush1.bf16.xpose.msra.mxu0 0
        %1228 = vmatprep.mubr.bf16.mxu0 0
        %1229 = vmatmul.mubr.bf16.gmra.mrb[0].mxu0 %v1191
        %v1230 = vpop.f32.mrb[0].mxu0
        %v1231 = vadd.f32 0.0, %v1230
        %v1232 = vpop.f32.mrb[0].mxu0
        %v1233 = vpop.f32.mrb[0].mxu0
        %v1234 = vpop.f32.mrb[0].mxu0
        %1235 = vdwg.mxu0
        %v1237 = vsel %vm1189, %v886, 0
        %v1240 = vsel %vm1189, %v1036, 0
        %1242 = vmatprep.subr.bf16.mxu0 0
        %1243 = vmatpush1.bf16.xpose.msra.mxu0 %v1240
        %1244 = vmatprep.subr.bf16.mxu0 0
        %1245 = vmatpush1.bf16.xpose.msra.mxu0 0
        %1246 = vmatprep.subr.bf16.mxu0 0
        %1247 = vmatpush1.bf16.xpose.msra.mxu0 0
        %1248 = vmatprep.subr.bf16.mxu0 0
        %1249 = vmatpush1.bf16.xpose.msra.mxu0 0
        %1250 = vmatprep.subr.bf16.mxu0 0
        %1251 = vmatpush1.bf16.xpose.msra.mxu0 0
        %1252 = vmatprep.subr.bf16.mxu0 0
        %1253 = vmatpush1.bf16.xpose.msra.mxu0 0
        %1254 = vmatprep.subr.bf16.mxu0 0
        %1255 = vmatpush1.bf16.xpose.msra.mxu0 0
        %1256 = vmatprep.subr.bf16.mxu0 0
        %1257 = vmatpush1.bf16.xpose.msra.mxu0 0
        %1258 = vmatprep.subr.bf16.mxu0 0
        %1259 = vmatpush1.bf16.xpose.msra.mxu0 0
        %1260 = vmatprep.subr.bf16.mxu0 0
        %1261 = vmatpush1.bf16.xpose.msra.mxu0 0
        %1262 = vmatprep.subr.bf16.mxu0 0
        %1263 = vmatpush1.bf16.xpose.msra.mxu0 0
        %1264 = vmatprep.subr.bf16.mxu0 0
        %1265 = vmatpush1.bf16.xpose.msra.mxu0 0
        %1266 = vmatprep.subr.bf16.mxu0 0
        %1267 = vmatpush1.bf16.xpose.msra.mxu0 0
        %1268 = vmatprep.subr.bf16.mxu0 0
        %1269 = vmatpush1.bf16.xpose.msra.mxu0 0
        %1270 = vmatprep.subr.bf16.mxu0 0
        %1271 = vmatpush1.bf16.xpose.msra.mxu0 0
        %1272 = vmatprep.subr.bf16.mxu0 0
        %1273 = vmatpush1.bf16.xpose.msra.mxu0 0
        %1274 = vmatprep.mubr.bf16.mxu0 0
        %1275 = vmatmul.mubr.bf16.gmra.mrb[0].mxu0 %v1237
        %v1276 = vpop.f32.mrb[0].mxu0
        %v1277 = vadd.f32 0.0, %v1276
        %v1278 = vpop.f32.mrb[0].mxu0
        %v1279 = vpop.f32.mrb[0].mxu0
        %v1280 = vpop.f32.mrb[0].mxu0
        %1281 = vdwg.mxu0
        %v1283 = vsel %vm1189, %v887, 0
        %v1286 = vsel %vm1189, %v1037, 0
        %1288 = vmatprep.subr.bf16.mxu0 0
        %1289 = vmatpush1.bf16.xpose.msra.mxu0 %v1286
        %1290 = vmatprep.subr.bf16.mxu0 0
        %1291 = vmatpush1.bf16.xpose.msra.mxu0 0
        %1292 = vmatprep.subr.bf16.mxu0 0
        %1293 = vmatpush1.bf16.xpose.msra.mxu0 0
        %1294 = vmatprep.subr.bf16.mxu0 0
        %1295 = vmatpush1.bf16.xpose.msra.mxu0 0
        %1296 = vmatprep.subr.bf16.mxu0 0
        %1297 = vmatpush1.bf16.xpose.msra.mxu0 0
        %1298 = vmatprep.subr.bf16.mxu0 0
        %1299 = vmatpush1.bf16.xpose.msra.mxu0 0
        %1300 = vmatprep.subr.bf16.mxu0 0
        %1301 = vmatpush1.bf16.xpose.msra.mxu0 0
        %1302 = vmatprep.subr.bf16.mxu0 0
        %1303 = vmatpush1.bf16.xpose.msra.mxu0 0
        %1304 = vmatprep.subr.bf16.mxu0 0
        %1305 = vmatpush1.bf16.xpose.msra.mxu0 0
        %1306 = vmatprep.subr.bf16.mxu0 0
        %1307 = vmatpush1.bf16.xpose.msra.mxu0 0
        %1308 = vmatprep.subr.bf16.mxu0 0
        %1309 = vmatpush1.bf16.xpose.msra.mxu0 0
        %1310 = vmatprep.subr.bf16.mxu0 0
        %1311 = vmatpush1.bf16.xpose.msra.mxu0 0
        %1312 = vmatprep.subr.bf16.mxu0 0
        %1313 = vmatpush1.bf16.xpose.msra.mxu0 0
        %1314 = vmatprep.subr.bf16.mxu0 0
        %1315 = vmatpush1.bf16.xpose.msra.mxu0 0
        %1316 = vmatprep.subr.bf16.mxu0 0
        %1317 = vmatpush1.bf16.xpose.msra.mxu0 0
        %1318 = vmatprep.subr.bf16.mxu0 0
        %1319 = vmatpush1.bf16.xpose.msra.mxu0 0
        %1320 = vmatprep.mubr.bf16.mxu0 0
        %1321 = vmatmul.mubr.bf16.gmra.mrb[0].mxu0 %v1283
        %v1322 = vpop.f32.mrb[0].mxu0
        %v1323 = vadd.f32 0.0, %v1322
        %v1324 = vpop.f32.mrb[0].mxu0
        %v1325 = vpop.f32.mrb[0].mxu0
        %v1326 = vpop.f32.mrb[0].mxu0
        %1327 = vdwg.mxu0
        %v1329 = vsel %vm1189, %v888, 0
        %v1332 = vsel %vm1189, %v1038, 0
        %1334 = vmatprep.subr.bf16.mxu0 0
        %1335 = vmatpush1.bf16.xpose.msra.mxu0 %v1332
        %1336 = vmatprep.subr.bf16.mxu0 0
        %1337 = vmatpush1.bf16.xpose.msra.mxu0 0
        %1338 = vmatprep.subr.bf16.mxu0 0
        %1339 = vmatpush1.bf16.xpose.msra.mxu0 0
        %1340 = vmatprep.subr.bf16.mxu0 0
        %1341 = vmatpush1.bf16.xpose.msra.mxu0 0
        %1342 = vmatprep.subr.bf16.mxu0 0
        %1343 = vmatpush1.bf16.xpose.msra.mxu0 0
        %1344 = vmatprep.subr.bf16.mxu0 0
        %1345 = vmatpush1.bf16.xpose.msra.mxu0 0
        %1346 = vmatprep.subr.bf16.mxu0 0
        %1347 = vmatpush1.bf16.xpose.msra.mxu0 0
        %1348 = vmatprep.subr.bf16.mxu0 0
        %1349 = vmatpush1.bf16.xpose.msra.mxu0 0
        %1350 = vmatprep.subr.bf16.mxu0 0
        %1351 = vmatpush1.bf16.xpose.msra.mxu0 0
        %1352 = vmatprep.subr.bf16.mxu0 0
        %1353 = vmatpush1.bf16.xpose.msra.mxu0 0
        %1354 = vmatprep.subr.bf16.mxu0 0
        %1355 = vmatpush1.bf16.xpose.msra.mxu0 0
        %1356 = vmatprep.subr.bf16.mxu0 0
        %1357 = vmatpush1.bf16.xpose.msra.mxu0 0
        %1358 = vmatprep.subr.bf16.mxu0 0
        %1359 = vmatpush1.bf16.xpose.msra.mxu0 0
        %1360 = vmatprep.subr.bf16.mxu0 0
        %1361 = vmatpush1.bf16.xpose.msra.mxu0 0
        %1362 = vmatprep.subr.bf16.mxu0 0
        %1363 = vmatpush1.bf16.xpose.msra.mxu0 0
        %1364 = vmatprep.subr.bf16.mxu0 0
        %1365 = vmatpush1.bf16.xpose.msra.mxu0 0
        %1366 = vmatprep.mubr.bf16.mxu0 0
        %1367 = vmatmul.mubr.bf16.gmra.mrb[0].mxu0 %v1329
        %v1368 = vpop.f32.mrb[0].mxu0
        %v1369 = vadd.f32 0.0, %v1368
        %v1370 = vpop.f32.mrb[0].mxu0
        %v1371 = vpop.f32.mrb[0].mxu0
        %v1372 = vpop.f32.mrb[0].mxu0
        %1373 = vdwg.mxu0
        %v1374 = vsel %vm1189, %v1231, -inf
        %1375 = vmax.xlane.f32.xlu0 %v1374
        %v1376 = vpop.xlane.xlu0 %1375
        %v1377 = vsel %vm1189, %v1277, -inf
        %1378 = vmax.xlane.f32.xlu0 %v1377
        %v1379 = vpop.xlane.xlu0 %1378
        %v1380 = vsel %vm1189, %v1323, -inf
        %1381 = vmax.xlane.f32.xlu0 %v1380
        %v1382 = vpop.xlane.xlu0 %1381
        %v1383 = vsel %vm1189, %v1369, -inf
        %1384 = vmax.xlane.f32.xlu0 %v1383
        %v1385 = vpop.xlane.xlu0 %1384
        %v1386 = vsub.f32 %v1231, %v1376
        %v1387 = vsub.f32 %v1277, %v1379
        %v1388 = vsub.f32 %v1323, %v1382
        %v1389 = vsub.f32 %v1369, %v1385
        %v1390 = vmul.f32 %v1386, 1.442695
        %v1391 = vpow.pop %v1390
        %v1392 = vmul.f32 %v1387, 1.442695
        %v1393 = vpow.pop %v1392
        %v1394 = vmul.f32 %v1388, 1.442695
        %v1395 = vpow.pop %v1394
        %v1396 = vmul.f32 %v1389, 1.442695
        %v1397 = vpow.pop %v1396
        %v1398 = vsel %vm1189, %v1391, 0.0
        %1399 = vadd.xlane.f32.xlu0 %v1398
        %v1400 = vpop.xlane.xlu0 %1399
        %v1401 = vsel %vm1189, %v1393, 0.0
        %1402 = vadd.xlane.f32.xlu0 %v1401
        %v1403 = vpop.xlane.xlu0 %1402
        %v1404 = vsel %vm1189, %v1395, 0.0
        %1405 = vadd.xlane.f32.xlu0 %v1404
        %v1406 = vpop.xlane.xlu0 %1405
        %v1407 = vsel %vm1189, %v1397, 0.0
        %1408 = vadd.xlane.f32.xlu0 %v1407
        %v1409 = vpop.xlane.xlu0 %1408
        %v1410 = vrcp.pop %v1400
        %v1411 = vrcp.pop %v1403
        %v1412 = vrcp.pop %v1406
        %v1413 = vrcp.pop %v1409
        %v1414 = vmul.f32 %v1391, %v1410
        %v1415 = vmul.f32 %v1393, %v1411
        %v1416 = vmul.f32 %v1395, %v1412
        %v1417 = vmul.f32 %v1397, %v1413
        %v1418 = vpack.c.bf16 %v1414, %v1414
        %v1419 = vpack.c.bf16 %v1415, %v1415
        %v1420 = vpack.c.bf16 %v1416, %v1416
        %v1421 = vpack.c.bf16 %v1417, %v1417
        %v1423 = vsel %vm1189, %v1418, 0
        %vm1425 = vcmask 1043456
        %v1427 = vsel %vm1425, %v1185, 0
        %1429 = vmatprep.subr.bf16.mxu0 0
        %1430 = vmatpush1.bf16.msra.mxu0 %v1427
        %1431 = vmatprep.subr.bf16.mxu0 0
        %1432 = vmatpush1.bf16.msra.mxu0 0
        %1433 = vmatprep.subr.bf16.mxu0 0
        %1434 = vmatpush1.bf16.msra.mxu0 0
        %1435 = vmatprep.subr.bf16.mxu0 0
        %1436 = vmatpush1.bf16.msra.mxu0 0
        %1437 = vmatprep.subr.bf16.mxu0 0
        %1438 = vmatpush1.bf16.msra.mxu0 0
        %1439 = vmatprep.subr.bf16.mxu0 0
        %1440 = vmatpush1.bf16.msra.mxu0 0
        %1441 = vmatprep.subr.bf16.mxu0 0
        %1442 = vmatpush1.bf16.msra.mxu0 0
        %1443 = vmatprep.subr.bf16.mxu0 0
        %1444 = vmatpush1.bf16.msra.mxu0 0
        %1445 = vmatprep.subr.bf16.mxu0 0
        %1446 = vmatpush1.bf16.msra.mxu0 0
        %1447 = vmatprep.subr.bf16.mxu0 0
        %1448 = vmatpush1.bf16.msra.mxu0 0
        %1449 = vmatprep.subr.bf16.mxu0 0
        %1450 = vmatpush1.bf16.msra.mxu0 0
        %1451 = vmatprep.subr.bf16.mxu0 0
        %1452 = vmatpush1.bf16.msra.mxu0 0
        %1453 = vmatprep.subr.bf16.mxu0 0
        %1454 = vmatpush1.bf16.msra.mxu0 0
        %1455 = vmatprep.subr.bf16.mxu0 0
        %1456 = vmatpush1.bf16.msra.mxu0 0
        %1457 = vmatprep.subr.bf16.mxu0 0
        %1458 = vmatpush1.bf16.msra.mxu0 0
        %1459 = vmatprep.subr.bf16.mxu0 0
        %1460 = vmatpush1.bf16.msra.mxu0 0
        %1461 = vmatprep.mubr.bf16.mxu0 0
        %1462 = vmatmul.mubr.bf16.gmra.mrb[0].mxu0 %v1423
        %v1463 = vpop.f32.mrb[0].mxu0
        %v1464 = vadd.f32 0.0, %v1463
        %v1465 = vpop.f32.mrb[0].mxu0
        %v1466 = vpop.f32.mrb[0].mxu0
        %v1467 = vpop.f32.mrb[0].mxu0
        %1468 = vdwg.mxu0
        %v1470 = vsel %vm1189, %v1419, 0
        %v1473 = vsel %vm1425, %v1186, 0
        %1475 = vmatprep.subr.bf16.mxu0 0
        %1476 = vmatpush1.bf16.msra.mxu0 %v1473
        %1477 = vmatprep.subr.bf16.mxu0 0
        %1478 = vmatpush1.bf16.msra.mxu0 0
        %1479 = vmatprep.subr.bf16.mxu0 0
        %1480 = vmatpush1.bf16.msra.mxu0 0
        %1481 = vmatprep.subr.bf16.mxu0 0
        %1482 = vmatpush1.bf16.msra.mxu0 0
        %1483 = vmatprep.subr.bf16.mxu0 0
        %1484 = vmatpush1.bf16.msra.mxu0 0
        %1485 = vmatprep.subr.bf16.mxu0 0
        %1486 = vmatpush1.bf16.msra.mxu0 0
        %1487 = vmatprep.subr.bf16.mxu0 0
        %1488 = vmatpush1.bf16.msra.mxu0 0
        %1489 = vmatprep.subr.bf16.mxu0 0
        %1490 = vmatpush1.bf16.msra.mxu0 0
        %1491 = vmatprep.subr.bf16.mxu0 0
        %1492 = vmatpush1.bf16.msra.mxu0 0
        %1493 = vmatprep.subr.bf16.mxu0 0
        %1494 = vmatpush1.bf16.msra.mxu0 0
        %1495 = vmatprep.subr.bf16.mxu0 0
        %1496 = vmatpush1.bf16.msra.mxu0 0
        %1497 = vmatprep.subr.bf16.mxu0 0
        %1498 = vmatpush1.bf16.msra.mxu0 0
        %1499 = vmatprep.subr.bf16.mxu0 0
        %1500 = vmatpush1.bf16.msra.mxu0 0
        %1501 = vmatprep.subr.bf16.mxu0 0
        %1502 = vmatpush1.bf16.msra.mxu0 0
        %1503 = vmatprep.subr.bf16.mxu0 0
        %1504 = vmatpush1.bf16.msra.mxu0 0
        %1505 = vmatprep.subr.bf16.mxu0 0
        %1506 = vmatpush1.bf16.msra.mxu0 0
        %1507 = vmatprep.mubr.bf16.mxu0 0
        %1508 = vmatmul.mubr.bf16.gmra.mrb[0].mxu0 %v1470
        %v1509 = vpop.f32.mrb[0].mxu0
        %v1510 = vadd.f32 0.0, %v1509
        %v1511 = vpop.f32.mrb[0].mxu0
        %v1512 = vpop.f32.mrb[0].mxu0
        %v1513 = vpop.f32.mrb[0].mxu0
        %1514 = vdwg.mxu0
        %v1516 = vsel %vm1189, %v1420, 0
        %v1519 = vsel %vm1425, %v1187, 0
        %1521 = vmatprep.subr.bf16.mxu0 0
        %1522 = vmatpush1.bf16.msra.mxu0 %v1519
        %1523 = vmatprep.subr.bf16.mxu0 0
        %1524 = vmatpush1.bf16.msra.mxu0 0
        %1525 = vmatprep.subr.bf16.mxu0 0
        %1526 = vmatpush1.bf16.msra.mxu0 0
        %1527 = vmatprep.subr.bf16.mxu0 0
        %1528 = vmatpush1.bf16.msra.mxu0 0
        %1529 = vmatprep.subr.bf16.mxu0 0
        %1530 = vmatpush1.bf16.msra.mxu0 0
        %1531 = vmatprep.subr.bf16.mxu0 0
        %1532 = vmatpush1.bf16.msra.mxu0 0
        %1533 = vmatprep.subr.bf16.mxu0 0
        %1534 = vmatpush1.bf16.msra.mxu0 0
        %1535 = vmatprep.subr.bf16.mxu0 0
        %1536 = vmatpush1.bf16.msra.mxu0 0
        %1537 = vmatprep.subr.bf16.mxu0 0
        %1538 = vmatpush1.bf16.msra.mxu0 0
        %1539 = vmatprep.subr.bf16.mxu0 0
        %1540 = vmatpush1.bf16.msra.mxu0 0
        %1541 = vmatprep.subr.bf16.mxu0 0
        %1542 = vmatpush1.bf16.msra.mxu0 0
        %1543 = vmatprep.subr.bf16.mxu0 0
        %1544 = vmatpush1.bf16.msra.mxu0 0
        %1545 = vmatprep.subr.bf16.mxu0 0
        %1546 = vmatpush1.bf16.msra.mxu0 0
        %1547 = vmatprep.subr.bf16.mxu0 0
        %1548 = vmatpush1.bf16.msra.mxu0 0
        %1549 = vmatprep.subr.bf16.mxu0 0
        %1550 = vmatpush1.bf16.msra.mxu0 0
        %1551 = vmatprep.subr.bf16.mxu0 0
        %1552 = vmatpush1.bf16.msra.mxu0 0
        %1553 = vmatprep.mubr.bf16.mxu0 0
        %1554 = vmatmul.mubr.bf16.gmra.mrb[0].mxu0 %v1516
        %v1555 = vpop.f32.mrb[0].mxu0
        %v1556 = vadd.f32 0.0, %v1555
        %v1557 = vpop.f32.mrb[0].mxu0
        %v1558 = vpop.f32.mrb[0].mxu0
        %v1559 = vpop.f32.mrb[0].mxu0
        %1560 = vdwg.mxu0
        %v1562 = vsel %vm1189, %v1421, 0
        %v1565 = vsel %vm1425, %v1188, 0
        %1567 = vmatprep.subr.bf16.mxu0 0
        %1568 = vmatpush1.bf16.msra.mxu0 %v1565
        %1569 = vmatprep.subr.bf16.mxu0 0
        %1570 = vmatpush1.bf16.msra.mxu0 0
        %1571 = vmatprep.subr.bf16.mxu0 0
        %1572 = vmatpush1.bf16.msra.mxu0 0
        %1573 = vmatprep.subr.bf16.mxu0 0
        %1574 = vmatpush1.bf16.msra.mxu0 0
        %1575 = vmatprep.subr.bf16.mxu0 0
        %1576 = vmatpush1.bf16.msra.mxu0 0
        %1577 = vmatprep.subr.bf16.mxu0 0
        %1578 = vmatpush1.bf16.msra.mxu0 0
        %1579 = vmatprep.subr.bf16.mxu0 0
        %1580 = vmatpush1.bf16.msra.mxu0 0
        %1581 = vmatprep.subr.bf16.mxu0 0
        %1582 = vmatpush1.bf16.msra.mxu0 0
        %1583 = vmatprep.subr.bf16.mxu0 0
        %1584 = vmatpush1.bf16.msra.mxu0 0
        %1585 = vmatprep.subr.bf16.mxu0 0
        %1586 = vmatpush1.bf16.msra.mxu0 0
        %1587 = vmatprep.subr.bf16.mxu0 0
        %1588 = vmatpush1.bf16.msra.mxu0 0
        %1589 = vmatprep.subr.bf16.mxu0 0
        %1590 = vmatpush1.bf16.msra.mxu0 0
        %1591 = vmatprep.subr.bf16.mxu0 0
        %1592 = vmatpush1.bf16.msra.mxu0 0
        %1593 = vmatprep.subr.bf16.mxu0 0
        %1594 = vmatpush1.bf16.msra.mxu0 0
        %1595 = vmatprep.subr.bf16.mxu0 0
        %1596 = vmatpush1.bf16.msra.mxu0 0
        %1597 = vmatprep.subr.bf16.mxu0 0
        %1598 = vmatpush1.bf16.msra.mxu0 0
        %1599 = vmatprep.mubr.bf16.mxu0 0
        %1600 = vmatmul.mubr.bf16.gmra.mrb[0].mxu0 %v1562
        %v1601 = vpop.f32.mrb[0].mxu0
        %v1602 = vadd.f32 0.0, %v1601
        %v1603 = vpop.f32.mrb[0].mxu0
        %v1604 = vpop.f32.mrb[0].mxu0
        %v1605 = vpop.f32.mrb[0].mxu0
        %1606 = vdwg.mxu0
        %v1607 = vcombine.low %v1464, %v1556
        %v1608 = vcombine.high %v1464, %v1556
        %v1610 = vunpack.c.l.s4 1983009808
        %v1611 = vunpack.c.0.s8 %v1610
        %v1612 = vlaneseq
        %v1613 = vshrl.u32 %v1612, 7
        %v1614 = vsub.s32 %v1611, %v1613
        %v1615 = vrot.slane %v1607, %v1614
        %v1617 = vunpack.c.l.s4 1983009808
        %v1618 = vunpack.c.0.s8 %v1617
        %v1619 = vlaneseq
        %v1620 = vshrl.u32 %v1619, 7
        %v1621 = vsub.s32 %v1618, %v1620
        %v1622 = vrot.slane %v1608, %v1621
        %v1623 = vcombine.low %v1510, %v1602
        %v1624 = vcombine.high %v1510, %v1602
        %v1626 = vunpack.c.l.s4 1983009808
        %v1627 = vunpack.c.0.s8 %v1626
        %v1628 = vlaneseq
        %v1629 = vshrl.u32 %v1628, 7
        %v1630 = vsub.s32 %v1627, %v1629
        %v1631 = vrot.slane %v1623, %v1630
        %v1633 = vunpack.c.l.s4 1983009808
        %v1634 = vunpack.c.0.s8 %v1633
        %v1635 = vlaneseq
        %v1636 = vshrl.u32 %v1635, 7
        %v1637 = vsub.s32 %v1634, %v1636
        %v1638 = vrot.slane %v1624, %v1637
        %v1639 = vcombine.low %v1615, %v1631
        %v1640 = vcombine.high %v1615, %v1631
        %v1642 = vunpack.c.l.s4 1934713408
        %v1643 = vunpack.c.0.s8 %v1642
        %v1644 = vlaneseq
        %v1645 = vshrl.u32 %v1644, 7
        %v1646 = vsub.s32 %v1643, %v1645
        %v1647 = vrot.slane %v1639, %v1646
        %v1649 = vunpack.c.l.s4 1934713408
        %v1650 = vunpack.c.0.s8 %v1649
        %v1651 = vlaneseq
        %v1652 = vshrl.u32 %v1651, 7
        %v1653 = vsub.s32 %v1650, %v1652
        %v1654 = vrot.slane %v1640, %v1653
        %v1655 = vcombine.low %v1622, %v1638
        %v1656 = vcombine.high %v1622, %v1638
        %v1658 = vunpack.c.l.s4 1934713408
        %v1659 = vunpack.c.0.s8 %v1658
        %v1660 = vlaneseq
        %v1661 = vshrl.u32 %v1660, 7
        %v1662 = vsub.s32 %v1659, %v1661
        %v1663 = vrot.slane %v1655, %v1662
        %v1665 = vunpack.c.l.s4 1934713408
        %v1666 = vunpack.c.0.s8 %v1665
        %v1667 = vlaneseq
        %v1668 = vshrl.u32 %v1667, 7
        %v1669 = vsub.s32 %v1666, %v1668
        %v1670 = vrot.slane %v1656, %v1669
        %v1671 = vcombine.high %v1647, 0.0
        %v1672 = vcombine.high %v1654, 0.0
        %v1673 = vcombine.high %v1663, 0.0
        %v1674 = vcombine.high %v1670, 0.0
        %v1675 = vcombine.low %v1647, %v1654
        %v1677 = vunpack.c.l.s4 1983009808
        %v1678 = vunpack.c.0.s8 %v1677
        %v1679 = vlaneseq
        %v1680 = vshrl.u32 %v1679, 7
        %v1681 = vsub.s32 %v1678, %v1680
        %v1682 = vrot.slane %v1675, %v1681
        %v1683 = vcombine.low %v1671, %v1672
        %v1685 = vunpack.c.l.s4 1983009808
        %v1686 = vunpack.c.0.s8 %v1685
        %v1687 = vlaneseq
        %v1688 = vshrl.u32 %v1687, 7
        %v1689 = vsub.s32 %v1686, %v1688
        %v1690 = vrot.slane %v1683, %v1689
        %v1691 = vcombine.low %v1663, %v1670
        %v1693 = vunpack.c.l.s4 1983009808
        %v1694 = vunpack.c.0.s8 %v1693
        %v1695 = vlaneseq
        %v1696 = vshrl.u32 %v1695, 7
        %v1697 = vsub.s32 %v1694, %v1696
        %v1698 = vrot.slane %v1691, %v1697
        %v1699 = vcombine.low %v1673, %v1674
        %v1701 = vunpack.c.l.s4 1983009808
        %v1702 = vunpack.c.0.s8 %v1701
        %v1703 = vlaneseq
        %v1704 = vshrl.u32 %v1703, 7
        %v1705 = vsub.s32 %v1702, %v1704
        %v1706 = vrot.slane %v1699, %v1705
        %v1707 = vcombine.low %v1682, %v1690
        %v1708 = vcombine.high %v1682, %v1690
        %v1710 = vunpack.c.l.s4 1934713408
        %v1711 = vunpack.c.0.s8 %v1710
        %v1712 = vlaneseq
        %v1713 = vshrl.u32 %v1712, 7
        %v1714 = vsub.s32 %v1711, %v1713
        %v1715 = vrot.slane %v1707, %v1714
        %v1717 = vunpack.c.l.s4 1934713408
        %v1718 = vunpack.c.0.s8 %v1717
        %v1719 = vlaneseq
        %v1720 = vshrl.u32 %v1719, 7
        %v1721 = vsub.s32 %v1718, %v1720
        %v1722 = vrot.slane %v1708, %v1721
        %v1723 = vcombine.low %v1698, %v1706
        %v1724 = vcombine.high %v1698, %v1706
        %v1726 = vunpack.c.l.s4 1934713408
        %v1727 = vunpack.c.0.s8 %v1726
        %v1728 = vlaneseq
        %v1729 = vshrl.u32 %v1728, 7
        %v1730 = vsub.s32 %v1727, %v1729
        %v1731 = vrot.slane %v1723, %v1730
        %v1733 = vunpack.c.l.s4 1934713408
        %v1734 = vunpack.c.0.s8 %v1733
        %v1735 = vlaneseq
        %v1736 = vshrl.u32 %v1735, 7
        %v1737 = vsub.s32 %v1734, %v1736
        %v1738 = vrot.slane %v1724, %v1737
        %v1739 = vcombine.low %v1715, %v1731
        %v1740 = vcombine.high %v1715, %v1731
        %v1741 = vcombine.low %v1722, %v1738
        %v1742 = vcombine.high %v1722, %v1738
        %1744 = vrot.lane.b32.xlu0 %v1740, 8
        %v1745 = vpop.permute.xlu0 %1744
        %1748 = vrot.lane.b32.xlu0 %v1741, 16
        %v1749 = vpop.permute.xlu0 %1748
        %1752 = vrot.lane.b32.xlu0 %v1742, 24
        %v1753 = vpop.permute.xlu0 %1752
        %v1755 = vsel %vm1189, %v1739, %v1745
        %vm1756 = vcmask 130048
        %v1757 = vsel %vm1756, %v1755, %v1749
        %vm1758 = vcmask 195584
        %v1759 = vsel %vm1758, %v1757, %v1753
        %v1760 = vpack.c.bf16 %v1759, %v1759
        %v1761 = vld [vmem:[%s9] sm:$0xf]
        %v1762 = vld [vmem:[%s9 + $0x4] sm:$0xf]
        %v1763 = vld [vmem:[%s9 + $0x8] sm:$0xf]
        %v1764 = vld [vmem:[%s9 + $0xc] sm:$0xf]
        %v1765 = vld [vmem:[%s10] sm:$0x1]
        %v1767 = vlaneseq
        %v1768 = vshrl.u32 %v1767, 7
        %v1769 = vsub.s32 0, %v1768
        %v1770 = vrot.slane %v1765, %v1769
        %v1776 = vunpack.c.l.b16 %v1761
        %v1777 = vunpack.c.l.b16 %v1762
        %v1778 = vunpack.c.l.b16 %v1763
        %v1779 = vunpack.c.l.b16 %v1764
        %v1780 = vpack.c.b16 %v1777, %v1776
        %v1781 = vpack.c.b16 %v1779, %v1778
        %v1785 = vsel %vm562, %v1760, 0
        %1787 = vmatprep.subr.bf16.mxu0 0
        %1788 = vmatpush1.bf16.msra.mxu0 %v1780
        %1789 = vmatprep.subr.bf16.mxu0 0
        %1790 = vmatpush1.bf16.msra.mxu0 %v1781
        %1791 = vmatprep.subr.bf16.mxu0 0
        %1792 = vmatpush1.bf16.msra.mxu0 0
        %1793 = vmatprep.subr.bf16.mxu0 0
        %1794 = vmatpush1.bf16.msra.mxu0 0
        %1795 = vmatprep.subr.bf16.mxu0 0
        %1796 = vmatpush1.bf16.msra.mxu0 0
        %1797 = vmatprep.subr.bf16.mxu0 0
        %1798 = vmatpush1.bf16.msra.mxu0 0
        %1799 = vmatprep.subr.bf16.mxu0 0
        %1800 = vmatpush1.bf16.msra.mxu0 0
        %1801 = vmatprep.subr.bf16.mxu0 0
        %1802 = vmatpush1.bf16.msra.mxu0 0
        %1803 = vmatprep.subr.bf16.mxu0 0
        %1804 = vmatpush1.bf16.msra.mxu0 0
        %1805 = vmatprep.subr.bf16.mxu0 0
        %1806 = vmatpush1.bf16.msra.mxu0 0
        %1807 = vmatprep.subr.bf16.mxu0 0
        %1808 = vmatpush1.bf16.msra.mxu0 0
        %1809 = vmatprep.subr.bf16.mxu0 0
        %1810 = vmatpush1.bf16.msra.mxu0 0
        %1811 = vmatprep.subr.bf16.mxu0 0
        %1812 = vmatpush1.bf16.msra.mxu0 0
        %1813 = vmatprep.subr.bf16.mxu0 0
        %1814 = vmatpush1.bf16.msra.mxu0 0
        %1815 = vmatprep.subr.bf16.mxu0 0
        %1816 = vmatpush1.bf16.msra.mxu0 0
        %1817 = vmatprep.subr.bf16.mxu0 0
        %1818 = vmatpush1.bf16.msra.mxu0 0
        %1819 = vmatprep.mubr.bf16.mxu0 0
        %1820 = vmatmul.mubr.bf16.gmra.mrb[0].mxu0 %v1785
        %v1821 = vpop.f32.mrb[0].mxu0
        %v1822 = vadd.f32 %v1770, %v1821
        %v1823 = vpop.f32.mrb[0].mxu0
        %v1824 = vpop.f32.mrb[0].mxu0
        %v1825 = vpop.f32.mrb[0].mxu0
        %1826 = vdwg.mxu0
        %1827 = vst.msk [vmem:[%s531] sm:$0xff] %vm562, %v1822
        %s1828 = sand.u32 %s303, 1
        %s1829 = scalar_lea.sflag [#allocation4], %s1828
        %s1830 = sand.u32 %s303, 1
        %s1831 = smul.addr %s1830, 8
        %s1832 = scalar_lea.vmem [#allocation13], %s1831
        // Predicated region
        $region89: #{tpu_custom_call.1} parent=63 // pred_check
          %p1833 = pneg %p313
        $region90: #{tpu_custom_call.1} parent=63 // pred_check_branch
          %1835 = sbr.rel (%p1833) target = $region92
        $region91: #{tpu_custom_call.1} parent=63 // pred_region
          %s1837 = ssub.s32 128, 128
          %1838 = vsyncadd %s1829, %s1837
          %s1839 = sadd.s32 %s38, %s37
          %s1840 = smul.addr %s1839, 128
          %s1841 = scalar_lea.hbm %s11, %s1840
          %s1843 = sshll.u32 %s1832, 4
          %s1844 = int_to_ptr.vmem [resolvable:$true] %s1843
          %1846 = dma.vmem_to_hbm [thread:$0]  %s1844, 128, %s1841, %s1829
        $region92: #{tpu_custom_call.1} parent=63 // pred_fallthru
          _
      $region64: #{tpu_custom_call.1} parent=5 // pred_fallthru
        _
      %p1847 = scmp.le.s32.totalorder 2, %s28
      // Predicated region
      $region93: #{tpu_custom_call.1} parent=5 // pred_check
        %p1848 = pneg %p1847
      $region94: #{tpu_custom_call.1} parent=5 // pred_check_branch
        %1850 = sbr.rel (%p1848) target = $region96
      $region95: #{tpu_custom_call.1} parent=5 // pred_region
        %s1851 = ssub.s32 %s28, 2
        // Predicated region
        $region97: #{tpu_custom_call.1} parent=95 // pred_check
          %p1852 = pneg %p319
        $region98: #{tpu_custom_call.1} parent=95 // pred_check_branch
          %1854 = sbr.rel (%p1852) target = $region100
        $region99: #{tpu_custom_call.1} parent=95 // pred_region
          %s1855 = sand.u32 %s304, 1
          %s1856 = scalar_lea.sflag [#allocation4], %s1855
          %s1857 = sand.u32 %s304, 1
          %s1858 = smul.addr %s1857, 8
          %s1859 = scalar_lea.vmem [#allocation13], %s1858
          %1860 = dma.done %s1856, 128
        $region100: #{tpu_custom_call.1} parent=95 // pred_fallthru
          _
      $region96: #{tpu_custom_call.1} parent=5 // pred_fallthru
        _
    $region6: #{tpu_custom_call.1} parent=1 // loop_footer
      %s32 = sadd.s32 1, %s28
    $region7: #{tpu_custom_call.1} parent=1 // loop_footer_branch
      %27 = sbr.rel target = $region3
    $region8: #{tpu_custom_call.1} parent=1 // loop_exit
      _
    %1861 = vsyncpa [#allocation3], 1
    %s1862 = scalar_lea.sflag [#allocation3], 1
    %1863 = vsyncpa %s1862, 1
    %1864 = vsyncpa [#allocation6], 1
    %s1865 = scalar_lea.sflag [#allocation6], 1
    %1866 = vsyncpa %s1865, 1
    %1867 = vsyncpa [#allocation9], 1
    %1868 = vsyncpa [#allocation12], 1
    %1869 = vsyncpa [#allocation4], 1
    %s1870 = scalar_lea.sflag [#allocation4], 1
    %1871 = vsyncpa %s1870, 1

</llo_original>
